<compile_context>
chip_gen: v7x
topology: tpu7x:2x2x1
jax: 0.10.0
libtpu: 0.0.40
codegen_flags: <defaults>
</compile_context>

<pallas_src>
import functools
import math

import jax
import jax.numpy as jnp
from jax.experimental import pallas as pl
from jax.experimental.pallas import tpu as pltpu


# ----------------------------------------------------------------------------
# Fused multi-head cross-attention kernel (one batch *block* per grid step)
# ----------------------------------------------------------------------------

def _mha_kernel(q_ref, k_ref, v_ref,
                wq_ref, wk_ref, wv_ref,
                bq_ref, bk_ref, bv_ref,
                wo_ref, bo_ref,
                *refs, num_heads, need_weights):
    if need_weights:
        out_ref, attn_ref, ctx_scr = refs
    else:
        (out_ref, ctx_scr), attn_ref = refs, None

    B, Lq, E = q_ref.shape          # (batch_block, seq, emb)
    Lk = k_ref.shape[1]
    H = num_heads
    D = E // H

    # ---- fused input projections -------------------------------------------
    # One big MXU matmul per projection: (B*L, E) x (E, E), bf16 operands,
    # f32 accumulation.  The 1/sqrt(D) scale is already folded into wq/bq.
    q2 = q_ref[...].reshape(B * Lq, E)          # bf16, rows ordered (b, lq)
    k2 = k_ref[...].reshape(B * Lk, E)
    v2 = v_ref[...].reshape(B * Lk, E)

    Q = jnp.dot(q2, wq_ref[...], preferred_element_type=jnp.float32) + bq_ref[...]
    K = jnp.dot(k2, wk_ref[...], preferred_element_type=jnp.float32) + bk_ref[...]
    V = jnp.dot(v2, wv_ref[...], preferred_element_type=jnp.float32) + bv_ref[...]

    attn_acc = jnp.zeros((B, Lq, Lk), jnp.float32) if need_weights else None

    # ---- attention core ------------------------------------------------------
    # Static unroll over heads (H is small); within a head, scores/context are a
    # single batched dot_general over the B batch elements of this block.  Each
    # head's context is written straight into the VMEM scratch accumulator (no
    # concatenation, no growing live set of per-head contexts).
    for h in range(H):
        lo = h * D
        qh = Q[:, lo:lo + D].reshape(B, Lq, D).astype(jnp.bfloat16)
        kh = K[:, lo:lo + D].reshape(B, Lk, D).astype(jnp.bfloat16)
        vh = V[:, lo:lo + D].reshape(B, Lk, D).astype(jnp.bfloat16)

        # scores (B, Lq, Lk), f32 accumulation; softmax math stays f32.
        s = jax.lax.dot_general(qh, kh, (((2,), (2,)), ((0,), (0,))),
                                preferred_element_type=jnp.float32)
        s = s - jnp.max(s, axis=-1, keepdims=True)
        e = jnp.exp(s)
        p = e * pl.reciprocal(jnp.sum(e, axis=-1, keepdims=True), approx=True)

        if need_weights:
            attn_acc = attn_acc + p

        # context for this head: (B, Lq, D) -> VMEM scratch columns of head h.
        ctx_h = jax.lax.dot_general(p.astype(jnp.bfloat16), vh,
                                    (((2,), (1,)), ((0,), (0,))),
                                    preferred_element_type=jnp.float32)
        ctx_scr[:, lo:lo + D] = ctx_h.reshape(B * Lq, D).astype(ctx_scr.dtype)

    # ---- output projection ---------------------------------------------------
    out = jnp.dot(ctx_scr[...].astype(jnp.bfloat16), wo_ref[...],
                  preferred_element_type=jnp.float32) + bo_ref[...]
    out_ref[...] = out.reshape(B, Lq, E).astype(out_ref.dtype)

    if need_weights:
        # PyTorch default: average attention weights over heads.
        attn_ref[...] = (attn_acc * (1.0 / H)).astype(attn_ref.dtype)


def cross_attention_forward(params, query, key, value, *, num_heads,
                            need_weights=True, batch_block=8):
    """nn.MultiheadAttention forward.

    query: (Lq, N, E); key, value: (Lk, N, E)  (batch_first=False layout).
    Returns (attn_output (Lq, N, E), attn_weights (N, Lq, Lk) or None).
    """
    Lq, N, E = query.shape
    Lk = key.shape[0]
    assert E % num_heads == 0
    D = E // num_heads

    # Batch blocking: each grid step handles B_blk batch elements so the fused
    # projections see (B_blk*L, E) operands.  Pick B_blk so the grid still has
    # >1 step when N is large (keeps both v7x TensorCores busy); tune upward for
    # bigger MXU M-fill on v6e/v7x (>=256 rows) when N*Lq allows.
    B_blk = max(1, min(batch_block, N))
    n_blocks = pl.cdiv(N, B_blk)
    N_pad = n_blocks * B_blk

    # (L, N, E) -> (N, L, E), fused with the f32->bf16 downcast in one XLA op
    # per input — the kernel then DMAs half the bytes from HBM.
    q = jnp.transpose(query, (1, 0, 2)).astype(jnp.bfloat16)
    k = jnp.transpose(key, (1, 0, 2)).astype(jnp.bfloat16)
    v = jnp.transpose(value, (1, 0, 2)).astype(jnp.bfloat16)
    if N_pad != N:
        pad = ((0, N_pad - N), (0, 0), (0, 0))
        q, k, v = jnp.pad(q, pad), jnp.pad(k, pad), jnp.pad(v, pad)

    # Kernel-side params: bf16 weights (MXU-native, halves weight VMEM/DMA —
    # important for the v7x 64 MiB VMEM budget); fold 1/sqrt(D) into wq/bq.
    # In production convert these once, outside the step function.
    scale = 1.0 / math.sqrt(D)
    wq = (params['wq'] * scale).astype(jnp.bfloat16)
    bq = params['bq'] * scale
    wk = params['wk'].astype(jnp.bfloat16)
    wv = params['wv'].astype(jnp.bfloat16)
    wo = params['wo'].astype(jnp.bfloat16)
    bk, bv, bo = params['bk'], params['bv'], params['bo']

    kern = functools.partial(_mha_kernel, num_heads=num_heads,
                             need_weights=need_weights)

    mat_spec = pl.BlockSpec((E, E), lambda n: (0, 0))
    vec_spec = pl.BlockSpec((1, E), lambda n: (0, 0))
    out_spec = pl.BlockSpec((B_blk, Lq, E), lambda n: (n, 0, 0))
    if need_weights:
        out_shape = (jax.ShapeDtypeStruct((N_pad, Lq, E), jnp.float32),
                     jax.ShapeDtypeStruct((N_pad, Lq, Lk), jnp.float32))
        out_specs = (out_spec,
                     pl.BlockSpec((B_blk, Lq, Lk), lambda n: (n, 0, 0)))
    else:
        out_shape = jax.ShapeDtypeStruct((N_pad, Lq, E), jnp.float32)
        out_specs = out_spec

    res = pl.pallas_call(
        kern,
        grid=(n_blocks,),
        out_shape=out_shape,
        in_specs=[
            pl.BlockSpec((B_blk, Lq, E), lambda n: (n, 0, 0)),   # q
            pl.BlockSpec((B_blk, Lk, E), lambda n: (n, 0, 0)),   # k
            pl.BlockSpec((B_blk, Lk, E), lambda n: (n, 0, 0)),   # v
            mat_spec, mat_spec, mat_spec,                        # Wq, Wk, Wv
            vec_spec, vec_spec, vec_spec,                        # bq, bk, bv
            mat_spec, vec_spec,                                  # Wo, bo
        ],
        out_specs=out_specs,
        scratch_shapes=[pltpu.VMEM((B_blk * Lq, E), jnp.float32)],  # ctx accum
        compiler_params=pltpu.CompilerParams(
            dimension_semantics=("parallel",)),
    )(q, k, v, wq, wk, wv, bq, bk, bv, wo, bo)

    if need_weights:
        out_blk, attn = res
    else:
        out_blk, attn = res, None

    out_blk = out_blk[:N] if N_pad != N else out_blk
    out = jnp.transpose(out_blk, (1, 0, 2))        # back to (Lq, N, E)
    if need_weights and N_pad != N:
        attn = attn[:N]
    return out, attn


# ----------------------------------------------------------------------------
# Deterministic parameter construction (x @ W layout, PyTorch-like init)
# ----------------------------------------------------------------------------

def make_params(key, emb_dim):
    ks = jax.random.split(key, 8)
    bound = math.sqrt(6.0 / (emb_dim + emb_dim))   # xavier_uniform

    def xavier(k):
        return jax.random.uniform(k, (emb_dim, emb_dim), jnp.float32, -bound, bound)

    def small_bias(k):
        return jax.random.normal(k, (1, emb_dim), jnp.float32) * 0.01

    return {
        'wq': xavier(ks[0]), 'wk': xavier(ks[1]),
        'wv': xavier(ks[2]), 'wo': xavier(ks[3]),
        'bq': small_bias(ks[4]), 'bk': small_bias(ks[5]),
        'bv': small_bias(ks[6]), 'bo': small_bias(ks[7]),
    }


# ----------------------------------------------------------------------------
# Pure-JAX reference (f32, same math) for a correctness check
# ----------------------------------------------------------------------------

def _reference_mha(params, query, key, value, num_heads):
    Lq, N, E = query.shape
    Lk = key.shape[0]
    D = E // num_heads
    q = jnp.einsum('lne,ef->lnf', query, params['wq']) + params['bq'][0]
    k = jnp.einsum('lne,ef->lnf', key, params['wk']) + params['bk'][0]
    v = jnp.einsum('lne,ef->lnf', value, params['wv']) + params['bv'][0]

    def split(t, L):
        return t.reshape(L, N, num_heads, D).transpose(1, 2, 0, 3)   # (N,H,L,D)

    qh, kh, vh = split(q, Lq), split(k, Lk), split(v, Lk)
    s = jnp.einsum('nhqd,nhkd->nhqk', qh, kh) / math.sqrt(D)
    p = jax.nn.softmax(s, axis=-1)
    ctx = jnp.einsum('nhqk,nhkd->nhqd', p, vh)
    ctx = ctx.transpose(2, 0, 1, 3).reshape(Lq, N, E)
    out = jnp.einsum('lne,ef->lnf', ctx, params['wo']) + params['bo'][0]
    return out, p.mean(axis=1)


# ----------------------------------------------------------------------------

if __name__ == "__main__":
    EMB_DIM, NUM_HEADS = 32, 4
    LQ, LK, BATCH = 8, 8, 2

    key = jax.random.PRNGKey(0)
    kp, kq, kk, kv = jax.random.split(key, 4)
    params = make_params(kp, EMB_DIM)
    query = jax.random.normal(kq, (LQ, BATCH, EMB_DIM), jnp.float32)
    key_in = jax.random.normal(kk, (LK, BATCH, EMB_DIM), jnp.float32)
    value = jax.random.normal(kv, (LK, BATCH, EMB_DIM), jnp.float32)

    fwd = jax.jit(functools.partial(cross_attention_forward, num_heads=NUM_HEADS))
    out, attn = fwd(params, query, key_in, value)
    jax.block_until_ready((out, attn))

    assert out.shape == (LQ, BATCH, EMB_DIM), out.shape
    assert attn.shape == (BATCH, LQ, LK), attn.shape

    ref_out, ref_attn = _reference_mha(params, query, key_in, value, NUM_HEADS)
    # bf16 MXU operands + approx softmax reciprocal -> relaxed tolerance vs the
    # pure-f32 reference.
    assert jnp.allclose(out, ref_out, atol=5e-2, rtol=5e-2), \
        float(jnp.max(jnp.abs(out - ref_out)))
    assert jnp.allclose(attn, ref_attn, atol=3e-2, rtol=3e-2), \
        float(jnp.max(jnp.abs(attn - ref_attn)))

    print("KERNEL_OK")
</pallas_src>

<mosaic_0001>
module attributes {stable_mosaic.version = 11 : i64} {
  func.func @_mha_kernel(%arg0: i32, %arg1: memref<2x8x32xbf16, #tpu.memory_space<vmem>>, %arg2: memref<2x8x32xbf16, #tpu.memory_space<vmem>>, %arg3: memref<2x8x32xbf16, #tpu.memory_space<vmem>>, %arg4: memref<32x32xbf16, #tpu.memory_space<vmem>>, %arg5: memref<32x32xbf16, #tpu.memory_space<vmem>>, %arg6: memref<32x32xbf16, #tpu.memory_space<vmem>>, %arg7: memref<1x32xf32, #tpu.memory_space<vmem>>, %arg8: memref<1x32xf32, #tpu.memory_space<vmem>>, %arg9: memref<1x32xf32, #tpu.memory_space<vmem>>, %arg10: memref<32x32xbf16, #tpu.memory_space<vmem>>, %arg11: memref<1x32xf32, #tpu.memory_space<vmem>>, %arg12: memref<2x8x32xf32, #tpu.memory_space<vmem>>, %arg13: memref<2x8x8xf32, #tpu.memory_space<vmem>>, %arg14: memref<16x32xf32, #tpu.memory_space<vmem>>) attributes {dimension_semantics = [#tpu.dimension_semantics<parallel>], iteration_bounds = array<i64: 1>, scalar_prefetch = 0 : i64, scratch_operands = 1 : i64, tpu.core_type = #tpu.core_type<tc>, window_params = [{transform_indices = @transform_0, window_bounds = array<i64: 2, 8, 32>}, {transform_indices = @transform_1, window_bounds = array<i64: 2, 8, 32>}, {transform_indices = @transform_2, window_bounds = array<i64: 2, 8, 32>}, {pipeline_mode = #tpu.pipeline_mode<synchronous>, transform_indices = @transform_3, window_bounds = array<i64: 32, 32>}, {pipeline_mode = #tpu.pipeline_mode<synchronous>, transform_indices = @transform_4, window_bounds = array<i64: 32, 32>}, {pipeline_mode = #tpu.pipeline_mode<synchronous>, transform_indices = @transform_5, window_bounds = array<i64: 32, 32>}, {pipeline_mode = #tpu.pipeline_mode<synchronous>, transform_indices = @transform_6, window_bounds = array<i64: 1, 32>}, {pipeline_mode = #tpu.pipeline_mode<synchronous>, transform_indices = @transform_7, window_bounds = array<i64: 1, 32>}, {pipeline_mode = #tpu.pipeline_mode<synchronous>, transform_indices = @transform_8, window_bounds = array<i64: 1, 32>}, {pipeline_mode = #tpu.pipeline_mode<synchronous>, transform_indices = @transform_9, window_bounds = array<i64: 32, 32>}, {pipeline_mode = #tpu.pipeline_mode<synchronous>, transform_indices = @transform_10, window_bounds = array<i64: 1, 32>}, {transform_indices = @transform_11, window_bounds = array<i64: 2, 8, 32>}, {transform_indices = @transform_12, window_bounds = array<i64: 2, 8, 8>}]} {
    %c0 = arith.constant 0 : index
    %c0_0 = arith.constant 0 : index
    %c0_1 = arith.constant 0 : index
    %0 = vector.load %arg1[%c0, %c0_0, %c0_1] : memref<2x8x32xbf16, #tpu.memory_space<vmem>>, vector<2x8x32xbf16>
    %1 = vector.shape_cast %0 : vector<2x8x32xbf16> to vector<16x32xbf16>
    %c0_2 = arith.constant 0 : index
    %c0_3 = arith.constant 0 : index
    %c0_4 = arith.constant 0 : index
    %2 = vector.load %arg2[%c0_2, %c0_3, %c0_4] : memref<2x8x32xbf16, #tpu.memory_space<vmem>>, vector<2x8x32xbf16>
    %3 = vector.shape_cast %2 : vector<2x8x32xbf16> to vector<16x32xbf16>
    %c0_5 = arith.constant 0 : index
    %c0_6 = arith.constant 0 : index
    %c0_7 = arith.constant 0 : index
    %4 = vector.load %arg3[%c0_5, %c0_6, %c0_7] : memref<2x8x32xbf16, #tpu.memory_space<vmem>>, vector<2x8x32xbf16>
    %5 = vector.shape_cast %4 : vector<2x8x32xbf16> to vector<16x32xbf16>
    %c0_8 = arith.constant 0 : index
    %c0_9 = arith.constant 0 : index
    %6 = vector.load %arg4[%c0_8, %c0_9] : memref<32x32xbf16, #tpu.memory_space<vmem>>, vector<32x32xbf16>
    %cst = arith.constant dense<0.000000e+00> : vector<16x32xf32>
    %7 = tpu.matmul %1, %6, %cst {dimension_numbers = #tpu.dot_dimension_numbers<[1], [0], [0], [1], [0, 0, 1, 1], [], []>} : vector<16x32xbf16>, vector<32x32xbf16>, vector<16x32xf32> -> vector<16x32xf32>
    %c0_10 = arith.constant 0 : index
    %c0_11 = arith.constant 0 : index
    %8 = vector.load %arg7[%c0_10, %c0_11] : memref<1x32xf32, #tpu.memory_space<vmem>>, vector<1x32xf32>
    %9 = vector.broadcast %8 : vector<1x32xf32> to vector<16x32xf32>
    %10 = arith.addf %7, %9 : vector<16x32xf32>
    %c0_12 = arith.constant 0 : index
    %c0_13 = arith.constant 0 : index
    %11 = vector.load %arg5[%c0_12, %c0_13] : memref<32x32xbf16, #tpu.memory_space<vmem>>, vector<32x32xbf16>
    %cst_14 = arith.constant dense<0.000000e+00> : vector<16x32xf32>
    %12 = tpu.matmul %3, %11, %cst_14 {dimension_numbers = #tpu.dot_dimension_numbers<[1], [0], [0], [1], [0, 0, 1, 1], [], []>} : vector<16x32xbf16>, vector<32x32xbf16>, vector<16x32xf32> -> vector<16x32xf32>
    %c0_15 = arith.constant 0 : index
    %c0_16 = arith.constant 0 : index
    %13 = vector.load %arg8[%c0_15, %c0_16] : memref<1x32xf32, #tpu.memory_space<vmem>>, vector<1x32xf32>
    %14 = vector.broadcast %13 : vector<1x32xf32> to vector<16x32xf32>
    %15 = arith.addf %12, %14 : vector<16x32xf32>
    %c0_17 = arith.constant 0 : index
    %c0_18 = arith.constant 0 : index
    %16 = vector.load %arg6[%c0_17, %c0_18] : memref<32x32xbf16, #tpu.memory_space<vmem>>, vector<32x32xbf16>
    %cst_19 = arith.constant dense<0.000000e+00> : vector<16x32xf32>
    %17 = tpu.matmul %5, %16, %cst_19 {dimension_numbers = #tpu.dot_dimension_numbers<[1], [0], [0], [1], [0, 0, 1, 1], [], []>} : vector<16x32xbf16>, vector<32x32xbf16>, vector<16x32xf32> -> vector<16x32xf32>
    %c0_20 = arith.constant 0 : index
    %c0_21 = arith.constant 0 : index
    %18 = vector.load %arg9[%c0_20, %c0_21] : memref<1x32xf32, #tpu.memory_space<vmem>>, vector<1x32xf32>
    %19 = vector.broadcast %18 : vector<1x32xf32> to vector<16x32xf32>
    %20 = arith.addf %17, %19 : vector<16x32xf32>
    %cst_22 = arith.constant 0.000000e+00 : f32
    %21 = vector.broadcast %cst_22 : f32 to vector<2x8x8xf32>
    %22 = vector.extract_strided_slice %10 {offsets = [0, 0], sizes = [16, 8], strides = [1, 1]} : vector<16x32xf32> to vector<16x8xf32>
    %23 = vector.shape_cast %22 : vector<16x8xf32> to vector<2x8x8xf32>
    %24 = arith.truncf %23 : vector<2x8x8xf32> to vector<2x8x8xbf16>
    %25 = vector.extract_strided_slice %15 {offsets = [0, 0], sizes = [16, 8], strides = [1, 1]} : vector<16x32xf32> to vector<16x8xf32>
    %26 = vector.shape_cast %25 : vector<16x8xf32> to vector<2x8x8xf32>
    %27 = arith.truncf %26 : vector<2x8x8xf32> to vector<2x8x8xbf16>
    %28 = vector.extract_strided_slice %20 {offsets = [0, 0], sizes = [16, 8], strides = [1, 1]} : vector<16x32xf32> to vector<16x8xf32>
    %29 = vector.shape_cast %28 : vector<16x8xf32> to vector<2x8x8xf32>
    %30 = arith.truncf %29 : vector<2x8x8xf32> to vector<2x8x8xbf16>
    %cst_23 = arith.constant dense<0.000000e+00> : vector<2x8x8xf32>
    %31 = tpu.matmul %24, %27, %cst_23 {dimension_numbers = #tpu.dot_dimension_numbers<[2], [2], [1], [1], [0, 0, 0, 1, 1, 1], [0], [0]>} : vector<2x8x8xbf16>, vector<2x8x8xbf16>, vector<2x8x8xf32> -> vector<2x8x8xf32>
    %cst_24 = arith.constant dense<0xFF800000> : vector<2x8xf32>
    %32 = vector.multi_reduction <maximumf>, %31, %cst_24 [2] : vector<2x8x8xf32> to vector<2x8xf32>
    %33 = vector.shape_cast %32 : vector<2x8xf32> to vector<2x8x1xf32>
    %34 = vector.broadcast %33 : vector<2x8x1xf32> to vector<2x8x8xf32>
    %35 = arith.subf %31, %34 : vector<2x8x8xf32>
    %36 = math.exp %35 : vector<2x8x8xf32>
    %cst_25 = arith.constant dense<0.000000e+00> : vector<2x8xf32>
    %37 = vector.multi_reduction <add>, %36, %cst_25 [2] : vector<2x8x8xf32> to vector<2x8xf32>
    %38 = vector.shape_cast %37 : vector<2x8xf32> to vector<2x8x1xf32>
    %39 = tpu.reciprocal %38 {approx = true} : vector<2x8x1xf32> -> vector<2x8x1xf32>
    %40 = vector.broadcast %39 : vector<2x8x1xf32> to vector<2x8x8xf32>
    %41 = arith.mulf %36, %40 : vector<2x8x8xf32>
    %42 = arith.addf %21, %41 : vector<2x8x8xf32>
    %43 = arith.truncf %41 : vector<2x8x8xf32> to vector<2x8x8xbf16>
    %cst_26 = arith.constant dense<0.000000e+00> : vector<2x8x8xf32>
    %44 = tpu.matmul %43, %30, %cst_26 {dimension_numbers = #tpu.dot_dimension_numbers<[2], [1], [1], [2], [0, 0, 0, 1, 1, 2], [0], [0]>} : vector<2x8x8xbf16>, vector<2x8x8xbf16>, vector<2x8x8xf32> -> vector<2x8x8xf32>
    %45 = vector.shape_cast %44 : vector<2x8x8xf32> to vector<16x8xf32>
    %c0_27 = arith.constant 0 : index
    %c0_28 = arith.constant 0 : index
    %46 = vector.load %arg14[%c0_27, %c0_28] : memref<16x32xf32, #tpu.memory_space<vmem>>, vector<16x8xf32>
    tpu.vector_store %arg14[%c0_27, %c0_28], %45 {strides = array<i32>} : memref<16x32xf32, #tpu.memory_space<vmem>>, vector<16x8xf32>,
    %47 = vector.extract_strided_slice %10 {offsets = [0, 8], sizes = [16, 8], strides = [1, 1]} : vector<16x32xf32> to vector<16x8xf32>
    %48 = vector.shape_cast %47 : vector<16x8xf32> to vector<2x8x8xf32>
    %49 = arith.truncf %48 : vector<2x8x8xf32> to vector<2x8x8xbf16>
    %50 = vector.extract_strided_slice %15 {offsets = [0, 8], sizes = [16, 8], strides = [1, 1]} : vector<16x32xf32> to vector<16x8xf32>
    %51 = vector.shape_cast %50 : vector<16x8xf32> to vector<2x8x8xf32>
    %52 = arith.truncf %51 : vector<2x8x8xf32> to vector<2x8x8xbf16>
    %53 = vector.extract_strided_slice %20 {offsets = [0, 8], sizes = [16, 8], strides = [1, 1]} : vector<16x32xf32> to vector<16x8xf32>
    %54 = vector.shape_cast %53 : vector<16x8xf32> to vector<2x8x8xf32>
    %55 = arith.truncf %54 : vector<2x8x8xf32> to vector<2x8x8xbf16>
    %cst_29 = arith.constant dense<0.000000e+00> : vector<2x8x8xf32>
    %56 = tpu.matmul %49, %52, %cst_29 {dimension_numbers = #tpu.dot_dimension_numbers<[2], [2], [1], [1], [0, 0, 0, 1, 1, 1], [0], [0]>} : vector<2x8x8xbf16>, vector<2x8x8xbf16>, vector<2x8x8xf32> -> vector<2x8x8xf32>
    %cst_30 = arith.constant dense<0xFF800000> : vector<2x8xf32>
    %57 = vector.multi_reduction <maximumf>, %56, %cst_30 [2] : vector<2x8x8xf32> to vector<2x8xf32>
    %58 = vector.shape_cast %57 : vector<2x8xf32> to vector<2x8x1xf32>
    %59 = vector.broadcast %58 : vector<2x8x1xf32> to vector<2x8x8xf32>
    %60 = arith.subf %56, %59 : vector<2x8x8xf32>
    %61 = math.exp %60 : vector<2x8x8xf32>
    %cst_31 = arith.constant dense<0.000000e+00> : vector<2x8xf32>
    %62 = vector.multi_reduction <add>, %61, %cst_31 [2] : vector<2x8x8xf32> to vector<2x8xf32>
    %63 = vector.shape_cast %62 : vector<2x8xf32> to vector<2x8x1xf32>
    %64 = tpu.reciprocal %63 {approx = true} : vector<2x8x1xf32> -> vector<2x8x1xf32>
    %65 = vector.broadcast %64 : vector<2x8x1xf32> to vector<2x8x8xf32>
    %66 = arith.mulf %61, %65 : vector<2x8x8xf32>
    %67 = arith.addf %42, %66 : vector<2x8x8xf32>
    %68 = arith.truncf %66 : vector<2x8x8xf32> to vector<2x8x8xbf16>
    %cst_32 = arith.constant dense<0.000000e+00> : vector<2x8x8xf32>
    %69 = tpu.matmul %68, %55, %cst_32 {dimension_numbers = #tpu.dot_dimension_numbers<[2], [1], [1], [2], [0, 0, 0, 1, 1, 2], [0], [0]>} : vector<2x8x8xbf16>, vector<2x8x8xbf16>, vector<2x8x8xf32> -> vector<2x8x8xf32>
    %70 = vector.shape_cast %69 : vector<2x8x8xf32> to vector<16x8xf32>
    %c0_33 = arith.constant 0 : index
    %c8 = arith.constant 8 : index
    %71 = vector.load %arg14[%c0_33, %c8] : memref<16x32xf32, #tpu.memory_space<vmem>>, vector<16x8xf32>
    tpu.vector_store %arg14[%c0_33, %c8], %70 {strides = array<i32>} : memref<16x32xf32, #tpu.memory_space<vmem>>, vector<16x8xf32>,
    %72 = vector.extract_strided_slice %10 {offsets = [0, 16], sizes = [16, 8], strides = [1, 1]} : vector<16x32xf32> to vector<16x8xf32>
    %73 = vector.shape_cast %72 : vector<16x8xf32> to vector<2x8x8xf32>
    %74 = arith.truncf %73 : vector<2x8x8xf32> to vector<2x8x8xbf16>
    %75 = vector.extract_strided_slice %15 {offsets = [0, 16], sizes = [16, 8], strides = [1, 1]} : vector<16x32xf32> to vector<16x8xf32>
    %76 = vector.shape_cast %75 : vector<16x8xf32> to vector<2x8x8xf32>
    %77 = arith.truncf %76 : vector<2x8x8xf32> to vector<2x8x8xbf16>
    %78 = vector.extract_strided_slice %20 {offsets = [0, 16], sizes = [16, 8], strides = [1, 1]} : vector<16x32xf32> to vector<16x8xf32>
    %79 = vector.shape_cast %78 : vector<16x8xf32> to vector<2x8x8xf32>
    %80 = arith.truncf %79 : vector<2x8x8xf32> to vector<2x8x8xbf16>
    %cst_34 = arith.constant dense<0.000000e+00> : vector<2x8x8xf32>
    %81 = tpu.matmul %74, %77, %cst_34 {dimension_numbers = #tpu.dot_dimension_numbers<[2], [2], [1], [1], [0, 0, 0, 1, 1, 1], [0], [0]>} : vector<2x8x8xbf16>, vector<2x8x8xbf16>, vector<2x8x8xf32> -> vector<2x8x8xf32>
    %cst_35 = arith.constant dense<0xFF800000> : vector<2x8xf32>
    %82 = vector.multi_reduction <maximumf>, %81, %cst_35 [2] : vector<2x8x8xf32> to vector<2x8xf32>
    %83 = vector.shape_cast %82 : vector<2x8xf32> to vector<2x8x1xf32>
    %84 = vector.broadcast %83 : vector<2x8x1xf32> to vector<2x8x8xf32>
    %85 = arith.subf %81, %84 : vector<2x8x8xf32>
    %86 = math.exp %85 : vector<2x8x8xf32>
    %cst_36 = arith.constant dense<0.000000e+00> : vector<2x8xf32>
    %87 = vector.multi_reduction <add>, %86, %cst_36 [2] : vector<2x8x8xf32> to vector<2x8xf32>
    %88 = vector.shape_cast %87 : vector<2x8xf32> to vector<2x8x1xf32>
    %89 = tpu.reciprocal %88 {approx = true} : vector<2x8x1xf32> -> vector<2x8x1xf32>
    %90 = vector.broadcast %89 : vector<2x8x1xf32> to vector<2x8x8xf32>
    %91 = arith.mulf %86, %90 : vector<2x8x8xf32>
    %92 = arith.addf %67, %91 : vector<2x8x8xf32>
    %93 = arith.truncf %91 : vector<2x8x8xf32> to vector<2x8x8xbf16>
    %cst_37 = arith.constant dense<0.000000e+00> : vector<2x8x8xf32>
    %94 = tpu.matmul %93, %80, %cst_37 {dimension_numbers = #tpu.dot_dimension_numbers<[2], [1], [1], [2], [0, 0, 0, 1, 1, 2], [0], [0]>} : vector<2x8x8xbf16>, vector<2x8x8xbf16>, vector<2x8x8xf32> -> vector<2x8x8xf32>
    %95 = vector.shape_cast %94 : vector<2x8x8xf32> to vector<16x8xf32>
    %c0_38 = arith.constant 0 : index
    %c16 = arith.constant 16 : index
    %96 = vector.load %arg14[%c0_38, %c16] : memref<16x32xf32, #tpu.memory_space<vmem>>, vector<16x8xf32>
    tpu.vector_store %arg14[%c0_38, %c16], %95 {strides = array<i32>} : memref<16x32xf32, #tpu.memory_space<vmem>>, vector<16x8xf32>,
    %97 = vector.extract_strided_slice %10 {offsets = [0, 24], sizes = [16, 8], strides = [1, 1]} : vector<16x32xf32> to vector<16x8xf32>
    %98 = vector.shape_cast %97 : vector<16x8xf32> to vector<2x8x8xf32>
    %99 = arith.truncf %98 : vector<2x8x8xf32> to vector<2x8x8xbf16>
    %100 = vector.extract_strided_slice %15 {offsets = [0, 24], sizes = [16, 8], strides = [1, 1]} : vector<16x32xf32> to vector<16x8xf32>
    %101 = vector.shape_cast %100 : vector<16x8xf32> to vector<2x8x8xf32>
    %102 = arith.truncf %101 : vector<2x8x8xf32> to vector<2x8x8xbf16>
    %103 = vector.extract_strided_slice %20 {offsets = [0, 24], sizes = [16, 8], strides = [1, 1]} : vector<16x32xf32> to vector<16x8xf32>
    %104 = vector.shape_cast %103 : vector<16x8xf32> to vector<2x8x8xf32>
    %105 = arith.truncf %104 : vector<2x8x8xf32> to vector<2x8x8xbf16>
    %cst_39 = arith.constant dense<0.000000e+00> : vector<2x8x8xf32>
    %106 = tpu.matmul %99, %102, %cst_39 {dimension_numbers = #tpu.dot_dimension_numbers<[2], [2], [1], [1], [0, 0, 0, 1, 1, 1], [0], [0]>} : vector<2x8x8xbf16>, vector<2x8x8xbf16>, vector<2x8x8xf32> -> vector<2x8x8xf32>
    %cst_40 = arith.constant dense<0xFF800000> : vector<2x8xf32>
    %107 = vector.multi_reduction <maximumf>, %106, %cst_40 [2] : vector<2x8x8xf32> to vector<2x8xf32>
    %108 = vector.shape_cast %107 : vector<2x8xf32> to vector<2x8x1xf32>
    %109 = vector.broadcast %108 : vector<2x8x1xf32> to vector<2x8x8xf32>
    %110 = arith.subf %106, %109 : vector<2x8x8xf32>
    %111 = math.exp %110 : vector<2x8x8xf32>
    %cst_41 = arith.constant dense<0.000000e+00> : vector<2x8xf32>
    %112 = vector.multi_reduction <add>, %111, %cst_41 [2] : vector<2x8x8xf32> to vector<2x8xf32>
    %113 = vector.shape_cast %112 : vector<2x8xf32> to vector<2x8x1xf32>
    %114 = tpu.reciprocal %113 {approx = true} : vector<2x8x1xf32> -> vector<2x8x1xf32>
    %115 = vector.broadcast %114 : vector<2x8x1xf32> to vector<2x8x8xf32>
    %116 = arith.mulf %111, %115 : vector<2x8x8xf32>
    %117 = arith.addf %92, %116 : vector<2x8x8xf32>
    %118 = arith.truncf %116 : vector<2x8x8xf32> to vector<2x8x8xbf16>
    %cst_42 = arith.constant dense<0.000000e+00> : vector<2x8x8xf32>
    %119 = tpu.matmul %118, %105, %cst_42 {dimension_numbers = #tpu.dot_dimension_numbers<[2], [1], [1], [2], [0, 0, 0, 1, 1, 2], [0], [0]>} : vector<2x8x8xbf16>, vector<2x8x8xbf16>, vector<2x8x8xf32> -> vector<2x8x8xf32>
    %120 = vector.shape_cast %119 : vector<2x8x8xf32> to vector<16x8xf32>
    %c0_43 = arith.constant 0 : index
    %c24 = arith.constant 24 : index
    %121 = vector.load %arg14[%c0_43, %c24] : memref<16x32xf32, #tpu.memory_space<vmem>>, vector<16x8xf32>
    tpu.vector_store %arg14[%c0_43, %c24], %120 {strides = array<i32>} : memref<16x32xf32, #tpu.memory_space<vmem>>, vector<16x8xf32>,
    %c0_44 = arith.constant 0 : index
    %c0_45 = arith.constant 0 : index
    %122 = vector.load %arg14[%c0_44, %c0_45] : memref<16x32xf32, #tpu.memory_space<vmem>>, vector<16x32xf32>
    %123 = arith.truncf %122 : vector<16x32xf32> to vector<16x32xbf16>
    %c0_46 = arith.constant 0 : index
    %c0_47 = arith.constant 0 : index
    %124 = vector.load %arg10[%c0_46, %c0_47] : memref<32x32xbf16, #tpu.memory_space<vmem>>, vector<32x32xbf16>
    %cst_48 = arith.constant dense<0.000000e+00> : vector<16x32xf32>
    %125 = tpu.matmul %123, %124, %cst_48 {dimension_numbers = #tpu.dot_dimension_numbers<[1], [0], [0], [1], [0, 0, 1, 1], [], []>} : vector<16x32xbf16>, vector<32x32xbf16>, vector<16x32xf32> -> vector<16x32xf32>
    %c0_49 = arith.constant 0 : index
    %c0_50 = arith.constant 0 : index
    %126 = vector.load %arg11[%c0_49, %c0_50] : memref<1x32xf32, #tpu.memory_space<vmem>>, vector<1x32xf32>
    %127 = vector.broadcast %126 : vector<1x32xf32> to vector<16x32xf32>
    %128 = arith.addf %125, %127 : vector<16x32xf32>
    %129 = vector.shape_cast %128 : vector<16x32xf32> to vector<2x8x32xf32>
    %c0_51 = arith.constant 0 : index
    %c0_52 = arith.constant 0 : index
    %c0_53 = arith.constant 0 : index
    %130 = vector.load %arg12[%c0_51, %c0_52, %c0_53] : memref<2x8x32xf32, #tpu.memory_space<vmem>>, vector<2x8x32xf32>
    tpu.vector_store %arg12[%c0_51, %c0_52, %c0_53], %129 {strides = array<i32>} : memref<2x8x32xf32, #tpu.memory_space<vmem>>, vector<2x8x32xf32>,
    %cst_54 = arith.constant 2.500000e-01 : f32
    %131 = vector.broadcast %cst_54 : f32 to vector<2x8x8xf32>
    %132 = arith.mulf %117, %131 : vector<2x8x8xf32>
    %c0_55 = arith.constant 0 : index
    %c0_56 = arith.constant 0 : index
    %c0_57 = arith.constant 0 : index
    %133 = vector.load %arg13[%c0_55, %c0_56, %c0_57] : memref<2x8x8xf32, #tpu.memory_space<vmem>>, vector<2x8x8xf32>
    tpu.vector_store %arg13[%c0_55, %c0_56, %c0_57], %132 {strides = array<i32>} : memref<2x8x8xf32, #tpu.memory_space<vmem>>, vector<2x8x8xf32>,
    return
  }
  func.func @transform_0(%arg0: i32) -> (i32, i32, i32) {
    %c0_i32 = arith.constant 0 : i32
    %c0_i32_0 = arith.constant 0 : i32
    %c0_i32_1 = arith.constant 0 : i32
    return %arg0, %c0_i32, %c0_i32_0 : i32, i32, i32
  }
  func.func @transform_1(%arg0: i32) -> (i32, i32, i32) {
    %c0_i32 = arith.constant 0 : i32
    %c0_i32_0 = arith.constant 0 : i32
    %c0_i32_1 = arith.constant 0 : i32
    return %arg0, %c0_i32, %c0_i32_0 : i32, i32, i32
  }
  func.func @transform_2(%arg0: i32) -> (i32, i32, i32) {
    %c0_i32 = arith.constant 0 : i32
    %c0_i32_0 = arith.constant 0 : i32
    %c0_i32_1 = arith.constant 0 : i32
    return %arg0, %c0_i32, %c0_i32_0 : i32, i32, i32
  }
  func.func @transform_3(%arg0: i32) -> (i32, i32) {
    %c0_i32 = arith.constant 0 : i32
    %c0_i32_0 = arith.constant 0 : i32
    %c0_i32_1 = arith.constant 0 : i32
    return %c0_i32, %c0_i32_0 : i32, i32
  }
  func.func @transform_4(%arg0: i32) -> (i32, i32) {
    %c0_i32 = arith.constant 0 : i32
    %c0_i32_0 = arith.constant 0 : i32
    %c0_i32_1 = arith.constant 0 : i32
    return %c0_i32, %c0_i32_0 : i32, i32
  }
  func.func @transform_5(%arg0: i32) -> (i32, i32) {
    %c0_i32 = arith.constant 0 : i32
    %c0_i32_0 = arith.constant 0 : i32
    %c0_i32_1 = arith.constant 0 : i32
    return %c0_i32, %c0_i32_0 : i32, i32
  }
  func.func @transform_6(%arg0: i32) -> (i32, i32) {
    %c0_i32 = arith.constant 0 : i32
    %c0_i32_0 = arith.constant 0 : i32
    %c0_i32_1 = arith.constant 0 : i32
    return %c0_i32, %c0_i32_0 : i32, i32
  }
  func.func @transform_7(%arg0: i32) -> (i32, i32) {
    %c0_i32 = arith.constant 0 : i32
    %c0_i32_0 = arith.constant 0 : i32
    %c0_i32_1 = arith.constant 0 : i32
    return %c0_i32, %c0_i32_0 : i32, i32
  }
  func.func @transform_8(%arg0: i32) -> (i32, i32) {
    %c0_i32 = arith.constant 0 : i32
    %c0_i32_0 = arith.constant 0 : i32
    %c0_i32_1 = arith.constant 0 : i32
    return %c0_i32, %c0_i32_0 : i32, i32
  }
  func.func @transform_9(%arg0: i32) -> (i32, i32) {
    %c0_i32 = arith.constant 0 : i32
    %c0_i32_0 = arith.constant 0 : i32
    %c0_i32_1 = arith.constant 0 : i32
    return %c0_i32, %c0_i32_0 : i32, i32
  }
  func.func @transform_10(%arg0: i32) -> (i32, i32) {
    %c0_i32 = arith.constant 0 : i32
    %c0_i32_0 = arith.constant 0 : i32
    %c0_i32_1 = arith.constant 0 : i32
    return %c0_i32, %c0_i32_0 : i32, i32
  }
  func.func @transform_11(%arg0: i32) -> (i32, i32, i32) {
    %c0_i32 = arith.constant 0 : i32
    %c0_i32_0 = arith.constant 0 : i32
    %c0_i32_1 = arith.constant 0 : i32
    return %arg0, %c0_i32, %c0_i32_0 : i32, i32, i32
  }
  func.func @transform_12(%arg0: i32) -> (i32, i32, i32) {
    %c0_i32 = arith.constant 0 : i32
    %c0_i32_0 = arith.constant 0 : i32
    %c0_i32_1 = arith.constant 0 : i32
    return %arg0, %c0_i32, %c0_i32_0 : i32, i32, i32
  }
}

</mosaic_0001>

<llo_original>
// kernel: cross_attention_forward.1
$region0: #{cross_attention_forward.1}
  #allocation0 [shape = 'u32[]', space=smem, size = 0x4, offset = 0x4, fixed_abs, tag = 'smem constant byte address 0x4 - core index']
  #allocation1 [shape = 'u32[144,128]{1,0:T(1,128)}', space=vmem, size = 0x12000, scoped, tag = 'internal scratch']
  #allocation2 [shape = 'f32[16,32]{1,0:T(8,128)}', space=vmem, size = 0x2000, scoped, tag = 'scratch operand']
  %s0 = inlined_call_operand.vmem [shape: bf16[2,8,32], index: 0, kind: input, shape index: {}]
  %s1 = inlined_call_operand.vmem [shape: bf16[2,8,32], index: 1, kind: input, shape index: {}]
  %s2 = inlined_call_operand.vmem [shape: bf16[2,8,32], index: 2, kind: input, shape index: {}]
  %s3 = inlined_call_operand.vmem [shape: bf16[32,32], index: 3, kind: input, shape index: {}]
  %s4 = inlined_call_operand.vmem [shape: bf16[32,32], index: 4, kind: input, shape index: {}]
  %s5 = inlined_call_operand.vmem [shape: bf16[32,32], index: 5, kind: input, shape index: {}]
  %s6 = inlined_call_operand.vmem [shape: f32[1,32], index: 6, kind: input, shape index: {}]
  %s7 = inlined_call_operand.vmem [shape: f32[1,32], index: 7, kind: input, shape index: {}]
  %s8 = inlined_call_operand.vmem [shape: f32[1,32], index: 8, kind: input, shape index: {}]
  %s9 = inlined_call_operand.vmem [shape: bf16[32,32], index: 9, kind: input, shape index: {}]
  %s10 = inlined_call_operand.vmem [shape: f32[1,32], index: 10, kind: input, shape index: {}]
  %s11 = inlined_call_operand.vmem [shape: f32[2,8,32], index: 11, kind: output, shape index: {0}]
  %s12 = inlined_call_operand.hbm [shape: f32[2,8,8], index: 12, kind: output, shape index: {1}]
  %13 = xla_tuple %s11, %s12
  %s14 = sld [smem:[#allocation0]]
  $region62: #{cross_attention_forward.1} parent=0
    _
  %s16 = ssub.s32 1, %s14
  %s17 = scalar_select 0, %s16, %s14
  $region1: #{cross_attention_forward.1} parent=0
    #allocation3 [shape = 'u8[8192]{0}', space=vmem, size = 0x2000, scoped, tag = 'output window, operand 1, single buffered']
    #allocation4 [shape = 's32[1]{0}', space=sflag, size = 0x4, scoped, tag = 'scoped memory for cross_attention_forward.1']
    %18 = vsyncpa [#allocation4], 0
    // Predicated region
    $region2: #{cross_attention_forward.1} parent=1 // pred_check
      _
    $region3: #{cross_attention_forward.1} parent=1 // pred_check_branch
      %20 = sbr.rel (0) target = $region5
    $region4: #{cross_attention_forward.1} parent=1 // pred_region
      _
    $region5: #{cross_attention_forward.1} parent=1 // pred_fallthru
      _
    // Predicated region
    $region6: #{cross_attention_forward.1} parent=1 // pred_check
      _
    $region7: #{cross_attention_forward.1} parent=1 // pred_check_branch
      %22 = sbr.rel (0) target = $region9
    $region8: #{cross_attention_forward.1} parent=1 // pred_region
      _
    $region9: #{cross_attention_forward.1} parent=1 // pred_fallthru
      _
    // Predicated region
    $region10: #{cross_attention_forward.1} parent=1 // pred_check
      _
    $region11: #{cross_attention_forward.1} parent=1 // pred_check_branch
      %24 = sbr.rel (0) target = $region13
    $region12: #{cross_attention_forward.1} parent=1 // pred_region
      _
    $region13: #{cross_attention_forward.1} parent=1 // pred_fallthru
      _
    // Predicated region
    $region14: #{cross_attention_forward.1} parent=1 // pred_check
      _
    $region15: #{cross_attention_forward.1} parent=1 // pred_check_branch
      %26 = sbr.rel (0) target = $region17
    $region16: #{cross_attention_forward.1} parent=1 // pred_region
      _
    $region17: #{cross_attention_forward.1} parent=1 // pred_fallthru
      _
    // Predicated region
    $region18: #{cross_attention_forward.1} parent=1 // pred_check
      _
    $region19: #{cross_attention_forward.1} parent=1 // pred_check_branch
      %28 = sbr.rel (0) target = $region21
    $region20: #{cross_attention_forward.1} parent=1 // pred_region
      _
    $region21: #{cross_attention_forward.1} parent=1 // pred_fallthru
      _
    // Predicated region
    $region22: #{cross_attention_forward.1} parent=1 // pred_check
      _
    $region23: #{cross_attention_forward.1} parent=1 // pred_check_branch
      %30 = sbr.rel (0) target = $region25
    $region24: #{cross_attention_forward.1} parent=1 // pred_region
      _
    $region25: #{cross_attention_forward.1} parent=1 // pred_fallthru
      _
    // Predicated region
    $region26: #{cross_attention_forward.1} parent=1 // pred_check
      _
    $region27: #{cross_attention_forward.1} parent=1 // pred_check_branch
      %32 = sbr.rel (0) target = $region29
    $region28: #{cross_attention_forward.1} parent=1 // pred_region
      _
    $region29: #{cross_attention_forward.1} parent=1 // pred_fallthru
      _
    // Predicated region
    $region30: #{cross_attention_forward.1} parent=1 // pred_check
      _
    $region31: #{cross_attention_forward.1} parent=1 // pred_check_branch
      %34 = sbr.rel (0) target = $region33
    $region32: #{cross_attention_forward.1} parent=1 // pred_region
      _
    $region33: #{cross_attention_forward.1} parent=1 // pred_fallthru
      _
    // Predicated region
    $region34: #{cross_attention_forward.1} parent=1 // pred_check
      _
    $region35: #{cross_attention_forward.1} parent=1 // pred_check_branch
      %36 = sbr.rel (0) target = $region37
    $region36: #{cross_attention_forward.1} parent=1 // pred_region
      _
    $region37: #{cross_attention_forward.1} parent=1 // pred_fallthru
      _
    // Predicated region
    $region38: #{cross_attention_forward.1} parent=1 // pred_check
      _
    $region39: #{cross_attention_forward.1} parent=1 // pred_check_branch
      %38 = sbr.rel (0) target = $region41
    $region40: #{cross_attention_forward.1} parent=1 // pred_region
      _
    $region41: #{cross_attention_forward.1} parent=1 // pred_fallthru
      _
    // Predicated region
    $region42: #{cross_attention_forward.1} parent=1 // pred_check
      _
    $region43: #{cross_attention_forward.1} parent=1 // pred_check_branch
      %40 = sbr.rel (0) target = $region45
    $region44: #{cross_attention_forward.1} parent=1 // pred_region
      _
    $region45: #{cross_attention_forward.1} parent=1 // pred_fallthru
      _
    %v42 = vld [vmem:[%s0] sm:$0xf]
    %v43 = vld [vmem:[%s0 + $0x4] sm:$0xf]
    %v44 = vld [vmem:[%s1] sm:$0xf]
    %v45 = vld [vmem:[%s1 + $0x4] sm:$0xf]
    %v46 = vld [vmem:[%s2] sm:$0xf]
    %v47 = vld [vmem:[%s2 + $0x4] sm:$0xf]
    %v48 = vld [vmem:[%s3] sm:$0xf]
    %v49 = vld [vmem:[%s3 + $0x4] sm:$0xf]
    %v50 = vld [vmem:[%s3 + $0x8] sm:$0xf]
    %v51 = vld [vmem:[%s3 + $0xc] sm:$0xf]
    %v52 = vld [vmem:[%s6] sm:$0x1]
    %v54 = vlaneseq
    %v55 = vshrl.u32 %v54, 7
    %v56 = vsub.s32 0, %v55
    %v57 = vrot.slane %v52, %v56
    %v61 = vunpack.c.l.b16 %v42
    %v62 = vunpack.c.l.b16 %v43
    %v63 = vpack.c.b16 %v62, %v61
    %v68 = vunpack.c.l.b16 %v48
    %v69 = vunpack.c.l.b16 %v49
    %v70 = vunpack.c.l.b16 %v50
    %v71 = vunpack.c.l.b16 %v51
    %v72 = vpack.c.b16 %v69, %v68
    %v73 = vpack.c.b16 %v71, %v70
    %vm76 = vcmask 261120
    %v78 = vsel %vm76, %v63, 0
    %80 = vmatprep.subr.bf16.mxu0 0
    %81 = vmatpush1.bf16.msra.mxu0 %v72
    %82 = vmatprep.subr.bf16.mxu0 0
    %83 = vmatpush1.bf16.msra.mxu0 %v73
    %84 = vmatprep.subr.bf16.mxu0 0
    %85 = vmatpush1.bf16.msra.mxu0 0
    %86 = vmatprep.subr.bf16.mxu0 0
    %87 = vmatpush1.bf16.msra.mxu0 0
    %88 = vmatprep.subr.bf16.mxu0 0
    %89 = vmatpush1.bf16.msra.mxu0 0
    %90 = vmatprep.subr.bf16.mxu0 0
    %91 = vmatpush1.bf16.msra.mxu0 0
    %92 = vmatprep.subr.bf16.mxu0 0
    %93 = vmatpush1.bf16.msra.mxu0 0
    %94 = vmatprep.subr.bf16.mxu0 0
    %95 = vmatpush1.bf16.msra.mxu0 0
    %96 = vmatprep.subr.bf16.mxu0 0
    %97 = vmatpush1.bf16.msra.mxu0 0
    %98 = vmatprep.subr.bf16.mxu0 0
    %99 = vmatpush1.bf16.msra.mxu0 0
    %100 = vmatprep.subr.bf16.mxu0 0
    %101 = vmatpush1.bf16.msra.mxu0 0
    %102 = vmatprep.subr.bf16.mxu0 0
    %103 = vmatpush1.bf16.msra.mxu0 0
    %104 = vmatprep.subr.bf16.mxu0 0
    %105 = vmatpush1.bf16.msra.mxu0 0
    %106 = vmatprep.subr.bf16.mxu0 0
    %107 = vmatpush1.bf16.msra.mxu0 0
    %108 = vmatprep.subr.bf16.mxu0 0
    %109 = vmatpush1.bf16.msra.mxu0 0
    %110 = vmatprep.subr.bf16.mxu0 0
    %111 = vmatpush1.bf16.msra.mxu0 0
    %112 = vmatprep.mubr.bf16.mxu0 0
    %113 = vmatmul.mubr.bf16.gmra.mrb[0].mxu0 %v78
    %v114 = vpop.f32.mrb[0].mxu0
    %v115 = vadd.f32 %v57, %v114
    %v116 = vpop.f32.mrb[0].mxu0
    %v117 = vpop.f32.mrb[0].mxu0
    %v118 = vadd.f32 %v57, %v117
    %v119 = vpop.f32.mrb[0].mxu0
    %120 = vdwg.mxu0
    %v121 = vld [vmem:[%s4] sm:$0xf]
    %v122 = vld [vmem:[%s4 + $0x4] sm:$0xf]
    %v123 = vld [vmem:[%s4 + $0x8] sm:$0xf]
    %v124 = vld [vmem:[%s4 + $0xc] sm:$0xf]
    %v125 = vld [vmem:[%s7] sm:$0x1]
    %v127 = vlaneseq
    %v128 = vshrl.u32 %v127, 7
    %v129 = vsub.s32 0, %v128
    %v130 = vrot.slane %v125, %v129
    %v134 = vunpack.c.l.b16 %v44
    %v135 = vunpack.c.l.b16 %v45
    %v136 = vpack.c.b16 %v135, %v134
    %v141 = vunpack.c.l.b16 %v121
    %v142 = vunpack.c.l.b16 %v122
    %v143 = vunpack.c.l.b16 %v123
    %v144 = vunpack.c.l.b16 %v124
    %v145 = vpack.c.b16 %v142, %v141
    %v146 = vpack.c.b16 %v144, %v143
    %v150 = vsel %vm76, %v136, 0
    %152 = vmatprep.subr.bf16.mxu0 0
    %153 = vmatpush1.bf16.msra.mxu0 %v145
    %154 = vmatprep.subr.bf16.mxu0 0
    %155 = vmatpush1.bf16.msra.mxu0 %v146
    %156 = vmatprep.subr.bf16.mxu0 0
    %157 = vmatpush1.bf16.msra.mxu0 0
    %158 = vmatprep.subr.bf16.mxu0 0
    %159 = vmatpush1.bf16.msra.mxu0 0
    %160 = vmatprep.subr.bf16.mxu0 0
    %161 = vmatpush1.bf16.msra.mxu0 0
    %162 = vmatprep.subr.bf16.mxu0 0
    %163 = vmatpush1.bf16.msra.mxu0 0
    %164 = vmatprep.subr.bf16.mxu0 0
    %165 = vmatpush1.bf16.msra.mxu0 0
    %166 = vmatprep.subr.bf16.mxu0 0
    %167 = vmatpush1.bf16.msra.mxu0 0
    %168 = vmatprep.subr.bf16.mxu0 0
    %169 = vmatpush1.bf16.msra.mxu0 0
    %170 = vmatprep.subr.bf16.mxu0 0
    %171 = vmatpush1.bf16.msra.mxu0 0
    %172 = vmatprep.subr.bf16.mxu0 0
    %173 = vmatpush1.bf16.msra.mxu0 0
    %174 = vmatprep.subr.bf16.mxu0 0
    %175 = vmatpush1.bf16.msra.mxu0 0
    %176 = vmatprep.subr.bf16.mxu0 0
    %177 = vmatpush1.bf16.msra.mxu0 0
    %178 = vmatprep.subr.bf16.mxu0 0
    %179 = vmatpush1.bf16.msra.mxu0 0
    %180 = vmatprep.subr.bf16.mxu0 0
    %181 = vmatpush1.bf16.msra.mxu0 0
    %182 = vmatprep.subr.bf16.mxu0 0
    %183 = vmatpush1.bf16.msra.mxu0 0
    %184 = vmatprep.mubr.bf16.mxu0 0
    %185 = vmatmul.mubr.bf16.gmra.mrb[0].mxu0 %v150
    %v186 = vpop.f32.mrb[0].mxu0
    %v187 = vadd.f32 %v130, %v186
    %v188 = vpop.f32.mrb[0].mxu0
    %v189 = vpop.f32.mrb[0].mxu0
    %v190 = vadd.f32 %v130, %v189
    %v191 = vpop.f32.mrb[0].mxu0
    %192 = vdwg.mxu0
    %v193 = vld [vmem:[%s5] sm:$0xf]
    %v194 = vld [vmem:[%s5 + $0x4] sm:$0xf]
    %v195 = vld [vmem:[%s5 + $0x8] sm:$0xf]
    %v196 = vld [vmem:[%s5 + $0xc] sm:$0xf]
    %v197 = vld [vmem:[%s8] sm:$0x1]
    %v199 = vlaneseq
    %v200 = vshrl.u32 %v199, 7
    %v201 = vsub.s32 0, %v200
    %v202 = vrot.slane %v197, %v201
    %v206 = vunpack.c.l.b16 %v46
    %v207 = vunpack.c.l.b16 %v47
    %v208 = vpack.c.b16 %v207, %v206
    %v213 = vunpack.c.l.b16 %v193
    %v214 = vunpack.c.l.b16 %v194
    %v215 = vunpack.c.l.b16 %v195
    %v216 = vunpack.c.l.b16 %v196
    %v217 = vpack.c.b16 %v214, %v213
    %v218 = vpack.c.b16 %v216, %v215
    %v222 = vsel %vm76, %v208, 0
    %224 = vmatprep.subr.bf16.mxu0 0
    %225 = vmatpush1.bf16.msra.mxu0 %v217
    %226 = vmatprep.subr.bf16.mxu0 0
    %227 = vmatpush1.bf16.msra.mxu0 %v218
    %228 = vmatprep.subr.bf16.mxu0 0
    %229 = vmatpush1.bf16.msra.mxu0 0
    %230 = vmatprep.subr.bf16.mxu0 0
    %231 = vmatpush1.bf16.msra.mxu0 0
    %232 = vmatprep.subr.bf16.mxu0 0
    %233 = vmatpush1.bf16.msra.mxu0 0
    %234 = vmatprep.subr.bf16.mxu0 0
    %235 = vmatpush1.bf16.msra.mxu0 0
    %236 = vmatprep.subr.bf16.mxu0 0
    %237 = vmatpush1.bf16.msra.mxu0 0
    %238 = vmatprep.subr.bf16.mxu0 0
    %239 = vmatpush1.bf16.msra.mxu0 0
    %240 = vmatprep.subr.bf16.mxu0 0
    %241 = vmatpush1.bf16.msra.mxu0 0
    %242 = vmatprep.subr.bf16.mxu0 0
    %243 = vmatpush1.bf16.msra.mxu0 0
    %244 = vmatprep.subr.bf16.mxu0 0
    %245 = vmatpush1.bf16.msra.mxu0 0
    %246 = vmatprep.subr.bf16.mxu0 0
    %247 = vmatpush1.bf16.msra.mxu0 0
    %248 = vmatprep.subr.bf16.mxu0 0
    %249 = vmatpush1.bf16.msra.mxu0 0
    %250 = vmatprep.subr.bf16.mxu0 0
    %251 = vmatpush1.bf16.msra.mxu0 0
    %252 = vmatprep.subr.bf16.mxu0 0
    %253 = vmatpush1.bf16.msra.mxu0 0
    %254 = vmatprep.subr.bf16.mxu0 0
    %255 = vmatpush1.bf16.msra.mxu0 0
    %256 = vmatprep.mubr.bf16.mxu0 0
    %257 = vmatmul.mubr.bf16.gmra.mrb[0].mxu0 %v222
    %v258 = vpop.f32.mrb[0].mxu0
    %v259 = vadd.f32 %v202, %v258
    %v260 = vpop.f32.mrb[0].mxu0
    %v261 = vpop.f32.mrb[0].mxu0
    %v262 = vadd.f32 %v202, %v261
    %v263 = vpop.f32.mrb[0].mxu0
    %264 = vdwg.mxu0
    %v265 = vpack.c.bf16 %v115, %v115
    %v266 = vpack.c.bf16 %v118, %v118
    %v267 = vpack.c.bf16 %v187, %v187
    %v268 = vpack.c.bf16 %v190, %v190
    %v269 = vpack.c.bf16 %v259, %v259
    %v270 = vpack.c.bf16 %v262, %v262
    %vm271 = vcmask 64512
    %v273 = vsel %vm271, %v265, 0
    %v276 = vsel %vm271, %v267, 0
    %278 = vmatprep.subr.bf16.mxu0 0
    %279 = vmatpush1.bf16.xpose.msra.mxu0 %v276
    %280 = vmatprep.subr.bf16.mxu0 0
    %281 = vmatpush1.bf16.xpose.msra.mxu0 0
    %282 = vmatprep.subr.bf16.mxu0 0
    %283 = vmatpush1.bf16.xpose.msra.mxu0 0
    %284 = vmatprep.subr.bf16.mxu0 0
    %285 = vmatpush1.bf16.xpose.msra.mxu0 0
    %286 = vmatprep.subr.bf16.mxu0 0
    %287 = vmatpush1.bf16.xpose.msra.mxu0 0
    %288 = vmatprep.subr.bf16.mxu0 0
    %289 = vmatpush1.bf16.xpose.msra.mxu0 0
    %290 = vmatprep.subr.bf16.mxu0 0
    %291 = vmatpush1.bf16.xpose.msra.mxu0 0
    %292 = vmatprep.subr.bf16.mxu0 0
    %293 = vmatpush1.bf16.xpose.msra.mxu0 0
    %294 = vmatprep.subr.bf16.mxu0 0
    %295 = vmatpush1.bf16.xpose.msra.mxu0 0
    %296 = vmatprep.subr.bf16.mxu0 0
    %297 = vmatpush1.bf16.xpose.msra.mxu0 0
    %298 = vmatprep.subr.bf16.mxu0 0
    %299 = vmatpush1.bf16.xpose.msra.mxu0 0
    %300 = vmatprep.subr.bf16.mxu0 0
    %301 = vmatpush1.bf16.xpose.msra.mxu0 0
    %302 = vmatprep.subr.bf16.mxu0 0
    %303 = vmatpush1.bf16.xpose.msra.mxu0 0
    %304 = vmatprep.subr.bf16.mxu0 0
    %305 = vmatpush1.bf16.xpose.msra.mxu0 0
    %306 = vmatprep.subr.bf16.mxu0 0
    %307 = vmatpush1.bf16.xpose.msra.mxu0 0
    %308 = vmatprep.subr.bf16.mxu0 0
    %309 = vmatpush1.bf16.xpose.msra.mxu0 0
    %310 = vmatprep.mubr.bf16.mxu0 0
    %311 = vmatmul.mubr.bf16.gmra.mrb[0].mxu0 %v273
    %v312 = vpop.f32.mrb[0].mxu0
    %v313 = vadd.f32 0.0, %v312
    %v314 = vpop.f32.mrb[0].mxu0
    %v315 = vpop.f32.mrb[0].mxu0
    %v316 = vpop.f32.mrb[0].mxu0
    %317 = vdwg.mxu0
    %v319 = vsel %vm271, %v266, 0
    %v322 = vsel %vm271, %v268, 0
    %324 = vmatprep.subr.bf16.mxu0 0
    %325 = vmatpush1.bf16.xpose.msra.mxu0 %v322
    %326 = vmatprep.subr.bf16.mxu0 0
    %327 = vmatpush1.bf16.xpose.msra.mxu0 0
    %328 = vmatprep.subr.bf16.mxu0 0
    %329 = vmatpush1.bf16.xpose.msra.mxu0 0
    %330 = vmatprep.subr.bf16.mxu0 0
    %331 = vmatpush1.bf16.xpose.msra.mxu0 0
    %332 = vmatprep.subr.bf16.mxu0 0
    %333 = vmatpush1.bf16.xpose.msra.mxu0 0
    %334 = vmatprep.subr.bf16.mxu0 0
    %335 = vmatpush1.bf16.xpose.msra.mxu0 0
    %336 = vmatprep.subr.bf16.mxu0 0
    %337 = vmatpush1.bf16.xpose.msra.mxu0 0
    %338 = vmatprep.subr.bf16.mxu0 0
    %339 = vmatpush1.bf16.xpose.msra.mxu0 0
    %340 = vmatprep.subr.bf16.mxu0 0
    %341 = vmatpush1.bf16.xpose.msra.mxu0 0
    %342 = vmatprep.subr.bf16.mxu0 0
    %343 = vmatpush1.bf16.xpose.msra.mxu0 0
    %344 = vmatprep.subr.bf16.mxu0 0
    %345 = vmatpush1.bf16.xpose.msra.mxu0 0
    %346 = vmatprep.subr.bf16.mxu0 0
    %347 = vmatpush1.bf16.xpose.msra.mxu0 0
    %348 = vmatprep.subr.bf16.mxu0 0
    %349 = vmatpush1.bf16.xpose.msra.mxu0 0
    %350 = vmatprep.subr.bf16.mxu0 0
    %351 = vmatpush1.bf16.xpose.msra.mxu0 0
    %352 = vmatprep.subr.bf16.mxu0 0
    %353 = vmatpush1.bf16.xpose.msra.mxu0 0
    %354 = vmatprep.subr.bf16.mxu0 0
    %355 = vmatpush1.bf16.xpose.msra.mxu0 0
    %356 = vmatprep.mubr.bf16.mxu0 0
    %357 = vmatmul.mubr.bf16.gmra.mrb[0].mxu0 %v319
    %v358 = vpop.f32.mrb[0].mxu0
    %v359 = vadd.f32 0.0, %v358
    %v360 = vpop.f32.mrb[0].mxu0
    %v361 = vpop.f32.mrb[0].mxu0
    %v362 = vpop.f32.mrb[0].mxu0
    %363 = vdwg.mxu0
    %v364 = vsel %vm271, %v313, -inf
    %365 = vmax.xlane.f32.xlu0 %v364
    %v366 = vpop.xlane.xlu0 %365
    %v367 = vsel %vm271, %v359, -inf
    %368 = vmax.xlane.f32.xlu0 %v367
    %v369 = vpop.xlane.xlu0 %368
    %v370 = vsub.f32 %v313, %v366
    %v371 = vsub.f32 %v359, %v369
    %v372 = vmul.f32 %v370, 1.442695
    %v373 = vpow.pop %v372
    %v374 = vmul.f32 %v371, 1.442695
    %v375 = vpow.pop %v374
    %v376 = vsel %vm271, %v373, 0.0
    %377 = vadd.xlane.f32.xlu0 %v376
    %v378 = vpop.xlane.xlu0 %377
    %v379 = vsel %vm271, %v375, 0.0
    %380 = vadd.xlane.f32.xlu0 %v379
    %v381 = vpop.xlane.xlu0 %380
    %v382 = vrcp.pop %v378
    %v383 = vrcp.pop %v381
    %v384 = vmul.f32 %v373, %v382
    %v385 = vmul.f32 %v375, %v383
    %v386 = vadd.f32 %v384, 0.0
    %v387 = vadd.f32 %v385, 0.0
    %v388 = vpack.c.bf16 %v384, %v384
    %v389 = vpack.c.bf16 %v385, %v385
    %v391 = vsel %vm271, %v388, 0
    %vm393 = vcmask 1043456
    %v395 = vsel %vm393, %v269, 0
    %397 = vmatprep.subr.bf16.mxu0 0
    %398 = vmatpush1.bf16.msra.mxu0 %v395
    %399 = vmatprep.subr.bf16.mxu0 0
    %400 = vmatpush1.bf16.msra.mxu0 0
    %401 = vmatprep.subr.bf16.mxu0 0
    %402 = vmatpush1.bf16.msra.mxu0 0
    %403 = vmatprep.subr.bf16.mxu0 0
    %404 = vmatpush1.bf16.msra.mxu0 0
    %405 = vmatprep.subr.bf16.mxu0 0
    %406 = vmatpush1.bf16.msra.mxu0 0
    %407 = vmatprep.subr.bf16.mxu0 0
    %408 = vmatpush1.bf16.msra.mxu0 0
    %409 = vmatprep.subr.bf16.mxu0 0
    %410 = vmatpush1.bf16.msra.mxu0 0
    %411 = vmatprep.subr.bf16.mxu0 0
    %412 = vmatpush1.bf16.msra.mxu0 0
    %413 = vmatprep.subr.bf16.mxu0 0
    %414 = vmatpush1.bf16.msra.mxu0 0
    %415 = vmatprep.subr.bf16.mxu0 0
    %416 = vmatpush1.bf16.msra.mxu0 0
    %417 = vmatprep.subr.bf16.mxu0 0
    %418 = vmatpush1.bf16.msra.mxu0 0
    %419 = vmatprep.subr.bf16.mxu0 0
    %420 = vmatpush1.bf16.msra.mxu0 0
    %421 = vmatprep.subr.bf16.mxu0 0
    %422 = vmatpush1.bf16.msra.mxu0 0
    %423 = vmatprep.subr.bf16.mxu0 0
    %424 = vmatpush1.bf16.msra.mxu0 0
    %425 = vmatprep.subr.bf16.mxu0 0
    %426 = vmatpush1.bf16.msra.mxu0 0
    %427 = vmatprep.subr.bf16.mxu0 0
    %428 = vmatpush1.bf16.msra.mxu0 0
    %429 = vmatprep.mubr.bf16.mxu0 0
    %430 = vmatmul.mubr.bf16.gmra.mrb[0].mxu0 %v391
    %v431 = vpop.f32.mrb[0].mxu0
    %v432 = vadd.f32 0.0, %v431
    %v433 = vpop.f32.mrb[0].mxu0
    %v434 = vpop.f32.mrb[0].mxu0
    %v435 = vpop.f32.mrb[0].mxu0
    %436 = vdwg.mxu0
    %v438 = vsel %vm271, %v389, 0
    %v441 = vsel %vm393, %v270, 0
    %443 = vmatprep.subr.bf16.mxu0 0
    %444 = vmatpush1.bf16.msra.mxu0 %v441
    %445 = vmatprep.subr.bf16.mxu0 0
    %446 = vmatpush1.bf16.msra.mxu0 0
    %447 = vmatprep.subr.bf16.mxu0 0
    %448 = vmatpush1.bf16.msra.mxu0 0
    %449 = vmatprep.subr.bf16.mxu0 0
    %450 = vmatpush1.bf16.msra.mxu0 0
    %451 = vmatprep.subr.bf16.mxu0 0
    %452 = vmatpush1.bf16.msra.mxu0 0
    %453 = vmatprep.subr.bf16.mxu0 0
    %454 = vmatpush1.bf16.msra.mxu0 0
    %455 = vmatprep.subr.bf16.mxu0 0
    %456 = vmatpush1.bf16.msra.mxu0 0
    %457 = vmatprep.subr.bf16.mxu0 0
    %458 = vmatpush1.bf16.msra.mxu0 0
    %459 = vmatprep.subr.bf16.mxu0 0
    %460 = vmatpush1.bf16.msra.mxu0 0
    %461 = vmatprep.subr.bf16.mxu0 0
    %462 = vmatpush1.bf16.msra.mxu0 0
    %463 = vmatprep.subr.bf16.mxu0 0
    %464 = vmatpush1.bf16.msra.mxu0 0
    %465 = vmatprep.subr.bf16.mxu0 0
    %466 = vmatpush1.bf16.msra.mxu0 0
    %467 = vmatprep.subr.bf16.mxu0 0
    %468 = vmatpush1.bf16.msra.mxu0 0
    %469 = vmatprep.subr.bf16.mxu0 0
    %470 = vmatpush1.bf16.msra.mxu0 0
    %471 = vmatprep.subr.bf16.mxu0 0
    %472 = vmatpush1.bf16.msra.mxu0 0
    %473 = vmatprep.subr.bf16.mxu0 0
    %474 = vmatpush1.bf16.msra.mxu0 0
    %475 = vmatprep.mubr.bf16.mxu0 0
    %476 = vmatmul.mubr.bf16.gmra.mrb[0].mxu0 %v438
    %v477 = vpop.f32.mrb[0].mxu0
    %v478 = vadd.f32 0.0, %v477
    %v479 = vpop.f32.mrb[0].mxu0
    %v480 = vpop.f32.mrb[0].mxu0
    %v481 = vpop.f32.mrb[0].mxu0
    %482 = vdwg.mxu0
    %483 = vst.msk [vmem:[#allocation2] sm:$0xff] %vm271, %v432
    %484 = vst.msk [vmem:[#allocation2 + $0x8] sm:$0xff] %vm271, %v478
    %486 = vrot.lane.b32.xlu0 %v265, 120
    %v487 = vpop.permute.xlu0 %486
    %489 = vrot.lane.b32.xlu0 %v267, 120
    %v490 = vpop.permute.xlu0 %489
    %v492 = vsel %vm271, %v487, 0
    %v495 = vsel %vm271, %v490, 0
    %497 = vmatprep.subr.bf16.mxu0 0
    %498 = vmatpush1.bf16.xpose.msra.mxu0 %v495
    %499 = vmatprep.subr.bf16.mxu0 0
    %500 = vmatpush1.bf16.xpose.msra.mxu0 0
    %501 = vmatprep.subr.bf16.mxu0 0
    %502 = vmatpush1.bf16.xpose.msra.mxu0 0
    %503 = vmatprep.subr.bf16.mxu0 0
    %504 = vmatpush1.bf16.xpose.msra.mxu0 0
    %505 = vmatprep.subr.bf16.mxu0 0
    %506 = vmatpush1.bf16.xpose.msra.mxu0 0
    %507 = vmatprep.subr.bf16.mxu0 0
    %508 = vmatpush1.bf16.xpose.msra.mxu0 0
    %509 = vmatprep.subr.bf16.mxu0 0
    %510 = vmatpush1.bf16.xpose.msra.mxu0 0
    %511 = vmatprep.subr.bf16.mxu0 0
    %512 = vmatpush1.bf16.xpose.msra.mxu0 0
    %513 = vmatprep.subr.bf16.mxu0 0
    %514 = vmatpush1.bf16.xpose.msra.mxu0 0
    %515 = vmatprep.subr.bf16.mxu0 0
    %516 = vmatpush1.bf16.xpose.msra.mxu0 0
    %517 = vmatprep.subr.bf16.mxu0 0
    %518 = vmatpush1.bf16.xpose.msra.mxu0 0
    %519 = vmatprep.subr.bf16.mxu0 0
    %520 = vmatpush1.bf16.xpose.msra.mxu0 0
    %521 = vmatprep.subr.bf16.mxu0 0
    %522 = vmatpush1.bf16.xpose.msra.mxu0 0
    %523 = vmatprep.subr.bf16.mxu0 0
    %524 = vmatpush1.bf16.xpose.msra.mxu0 0
    %525 = vmatprep.subr.bf16.mxu0 0
    %526 = vmatpush1.bf16.xpose.msra.mxu0 0
    %527 = vmatprep.subr.bf16.mxu0 0
    %528 = vmatpush1.bf16.xpose.msra.mxu0 0
    %529 = vmatprep.mubr.bf16.mxu0 0
    %530 = vmatmul.mubr.bf16.gmra.mrb[0].mxu0 %v492
    %v531 = vpop.f32.mrb[0].mxu0
    %v532 = vadd.f32 0.0, %v531
    %v533 = vpop.f32.mrb[0].mxu0
    %v534 = vpop.f32.mrb[0].mxu0
    %v535 = vpop.f32.mrb[0].mxu0
    %536 = vdwg.mxu0
    %538 = vrot.lane.b32.xlu0 %v266, 120
    %v539 = vpop.permute.xlu0 %538
    %541 = vrot.lane.b32.xlu0 %v268, 120
    %v542 = vpop.permute.xlu0 %541
    %v544 = vsel %vm271, %v539, 0
    %v547 = vsel %vm271, %v542, 0
    %549 = vmatprep.subr.bf16.mxu0 0
    %550 = vmatpush1.bf16.xpose.msra.mxu0 %v547
    %551 = vmatprep.subr.bf16.mxu0 0
    %552 = vmatpush1.bf16.xpose.msra.mxu0 0
    %553 = vmatprep.subr.bf16.mxu0 0
    %554 = vmatpush1.bf16.xpose.msra.mxu0 0
    %555 = vmatprep.subr.bf16.mxu0 0
    %556 = vmatpush1.bf16.xpose.msra.mxu0 0
    %557 = vmatprep.subr.bf16.mxu0 0
    %558 = vmatpush1.bf16.xpose.msra.mxu0 0
    %559 = vmatprep.subr.bf16.mxu0 0
    %560 = vmatpush1.bf16.xpose.msra.mxu0 0
    %561 = vmatprep.subr.bf16.mxu0 0
    %562 = vmatpush1.bf16.xpose.msra.mxu0 0
    %563 = vmatprep.subr.bf16.mxu0 0
    %564 = vmatpush1.bf16.xpose.msra.mxu0 0
    %565 = vmatprep.subr.bf16.mxu0 0
    %566 = vmatpush1.bf16.xpose.msra.mxu0 0
    %567 = vmatprep.subr.bf16.mxu0 0
    %568 = vmatpush1.bf16.xpose.msra.mxu0 0
    %569 = vmatprep.subr.bf16.mxu0 0
    %570 = vmatpush1.bf16.xpose.msra.mxu0 0
    %571 = vmatprep.subr.bf16.mxu0 0
    %572 = vmatpush1.bf16.xpose.msra.mxu0 0
    %573 = vmatprep.subr.bf16.mxu0 0
    %574 = vmatpush1.bf16.xpose.msra.mxu0 0
    %575 = vmatprep.subr.bf16.mxu0 0
    %576 = vmatpush1.bf16.xpose.msra.mxu0 0
    %577 = vmatprep.subr.bf16.mxu0 0
    %578 = vmatpush1.bf16.xpose.msra.mxu0 0
    %579 = vmatprep.subr.bf16.mxu0 0
    %580 = vmatpush1.bf16.xpose.msra.mxu0 0
    %581 = vmatprep.mubr.bf16.mxu0 0
    %582 = vmatmul.mubr.bf16.gmra.mrb[0].mxu0 %v544
    %v583 = vpop.f32.mrb[0].mxu0
    %v584 = vadd.f32 0.0, %v583
    %v585 = vpop.f32.mrb[0].mxu0
    %v586 = vpop.f32.mrb[0].mxu0
    %v587 = vpop.f32.mrb[0].mxu0
    %588 = vdwg.mxu0
    %v589 = vsel %vm271, %v532, -inf
    %590 = vmax.xlane.f32.xlu0 %v589
    %v591 = vpop.xlane.xlu0 %590
    %v592 = vsel %vm271, %v584, -inf
    %593 = vmax.xlane.f32.xlu0 %v592
    %v594 = vpop.xlane.xlu0 %593
    %v595 = vsub.f32 %v532, %v591
    %v596 = vsub.f32 %v584, %v594
    %v597 = vmul.f32 %v595, 1.442695
    %v598 = vpow.pop %v597
    %v599 = vmul.f32 %v596, 1.442695
    %v600 = vpow.pop %v599
    %v601 = vsel %vm271, %v598, 0.0
    %602 = vadd.xlane.f32.xlu0 %v601
    %v603 = vpop.xlane.xlu0 %602
    %v604 = vsel %vm271, %v600, 0.0
    %605 = vadd.xlane.f32.xlu0 %v604
    %v606 = vpop.xlane.xlu0 %605
    %v607 = vrcp.pop %v603
    %v608 = vrcp.pop %v606
    %v609 = vmul.f32 %v598, %v607
    %v610 = vmul.f32 %v600, %v608
    %v611 = vadd.f32 %v386, %v609
    %v612 = vadd.f32 %v387, %v610
    %v613 = vpack.c.bf16 %v609, %v609
    %v614 = vpack.c.bf16 %v610, %v610
    %616 = vrot.lane.b32.xlu0 %v269, 120
    %v617 = vpop.permute.xlu0 %616
    %v619 = vsel %vm271, %v613, 0
    %v622 = vsel %vm393, %v617, 0
    %624 = vmatprep.subr.bf16.mxu0 0
    %625 = vmatpush1.bf16.msra.mxu0 %v622
    %626 = vmatprep.subr.bf16.mxu0 0
    %627 = vmatpush1.bf16.msra.mxu0 0
    %628 = vmatprep.subr.bf16.mxu0 0
    %629 = vmatpush1.bf16.msra.mxu0 0
    %630 = vmatprep.subr.bf16.mxu0 0
    %631 = vmatpush1.bf16.msra.mxu0 0
    %632 = vmatprep.subr.bf16.mxu0 0
    %633 = vmatpush1.bf16.msra.mxu0 0
    %634 = vmatprep.subr.bf16.mxu0 0
    %635 = vmatpush1.bf16.msra.mxu0 0
    %636 = vmatprep.subr.bf16.mxu0 0
    %637 = vmatpush1.bf16.msra.mxu0 0
    %638 = vmatprep.subr.bf16.mxu0 0
    %639 = vmatpush1.bf16.msra.mxu0 0
    %640 = vmatprep.subr.bf16.mxu0 0
    %641 = vmatpush1.bf16.msra.mxu0 0
    %642 = vmatprep.subr.bf16.mxu0 0
    %643 = vmatpush1.bf16.msra.mxu0 0
    %644 = vmatprep.subr.bf16.mxu0 0
    %645 = vmatpush1.bf16.msra.mxu0 0
    %646 = vmatprep.subr.bf16.mxu0 0
    %647 = vmatpush1.bf16.msra.mxu0 0
    %648 = vmatprep.subr.bf16.mxu0 0
    %649 = vmatpush1.bf16.msra.mxu0 0
    %650 = vmatprep.subr.bf16.mxu0 0
    %651 = vmatpush1.bf16.msra.mxu0 0
    %652 = vmatprep.subr.bf16.mxu0 0
    %653 = vmatpush1.bf16.msra.mxu0 0
    %654 = vmatprep.subr.bf16.mxu0 0
    %655 = vmatpush1.bf16.msra.mxu0 0
    %656 = vmatprep.mubr.bf16.mxu0 0
    %657 = vmatmul.mubr.bf16.gmra.mrb[0].mxu0 %v619
    %v658 = vpop.f32.mrb[0].mxu0
    %v659 = vadd.f32 0.0, %v658
    %v660 = vpop.f32.mrb[0].mxu0
    %v661 = vpop.f32.mrb[0].mxu0
    %v662 = vpop.f32.mrb[0].mxu0
    %663 = vdwg.mxu0
    %665 = vrot.lane.b32.xlu0 %v270, 120
    %v666 = vpop.permute.xlu0 %665
    %v668 = vsel %vm271, %v614, 0
    %v671 = vsel %vm393, %v666, 0
    %673 = vmatprep.subr.bf16.mxu0 0
    %674 = vmatpush1.bf16.msra.mxu0 %v671
    %675 = vmatprep.subr.bf16.mxu0 0
    %676 = vmatpush1.bf16.msra.mxu0 0
    %677 = vmatprep.subr.bf16.mxu0 0
    %678 = vmatpush1.bf16.msra.mxu0 0
    %679 = vmatprep.subr.bf16.mxu0 0
    %680 = vmatpush1.bf16.msra.mxu0 0
    %681 = vmatprep.subr.bf16.mxu0 0
    %682 = vmatpush1.bf16.msra.mxu0 0
    %683 = vmatprep.subr.bf16.mxu0 0
    %684 = vmatpush1.bf16.msra.mxu0 0
    %685 = vmatprep.subr.bf16.mxu0 0
    %686 = vmatpush1.bf16.msra.mxu0 0
    %687 = vmatprep.subr.bf16.mxu0 0
    %688 = vmatpush1.bf16.msra.mxu0 0
    %689 = vmatprep.subr.bf16.mxu0 0
    %690 = vmatpush1.bf16.msra.mxu0 0
    %691 = vmatprep.subr.bf16.mxu0 0
    %692 = vmatpush1.bf16.msra.mxu0 0
    %693 = vmatprep.subr.bf16.mxu0 0
    %694 = vmatpush1.bf16.msra.mxu0 0
    %695 = vmatprep.subr.bf16.mxu0 0
    %696 = vmatpush1.bf16.msra.mxu0 0
    %697 = vmatprep.subr.bf16.mxu0 0
    %698 = vmatpush1.bf16.msra.mxu0 0
    %699 = vmatprep.subr.bf16.mxu0 0
    %700 = vmatpush1.bf16.msra.mxu0 0
    %701 = vmatprep.subr.bf16.mxu0 0
    %702 = vmatpush1.bf16.msra.mxu0 0
    %703 = vmatprep.subr.bf16.mxu0 0
    %704 = vmatpush1.bf16.msra.mxu0 0
    %705 = vmatprep.mubr.bf16.mxu0 0
    %706 = vmatmul.mubr.bf16.gmra.mrb[0].mxu0 %v668
    %v707 = vpop.f32.mrb[0].mxu0
    %v708 = vadd.f32 0.0, %v707
    %v709 = vpop.f32.mrb[0].mxu0
    %v710 = vpop.f32.mrb[0].mxu0
    %v711 = vpop.f32.mrb[0].mxu0
    %712 = vdwg.mxu0
    %715 = vrot.lane.b32.xlu0 %v659, 8
    %v716 = vpop.permute.xlu0 %715
    %717 = vrot.lane.b32.xlu0 %v708, 8
    %v718 = vpop.permute.xlu0 %717
    %vm721 = vcmask 130112
    %722 = vst.msk [vmem:[#allocation2] sm:$0xff] %vm721, %v716
    %723 = vst.msk [vmem:[#allocation2 + $0x8] sm:$0xff] %vm721, %v718
    %724 = vrot.lane.b32.xlu0 %v265, 112
    %v725 = vpop.permute.xlu0 %724
    %726 = vrot.lane.b32.xlu0 %v267, 112
    %v727 = vpop.permute.xlu0 %726
    %v729 = vsel %vm271, %v725, 0
    %v732 = vsel %vm271, %v727, 0
    %734 = vmatprep.subr.bf16.mxu0 0
    %735 = vmatpush1.bf16.xpose.msra.mxu0 %v732
    %736 = vmatprep.subr.bf16.mxu0 0
    %737 = vmatpush1.bf16.xpose.msra.mxu0 0
    %738 = vmatprep.subr.bf16.mxu0 0
    %739 = vmatpush1.bf16.xpose.msra.mxu0 0
    %740 = vmatprep.subr.bf16.mxu0 0
    %741 = vmatpush1.bf16.xpose.msra.mxu0 0
    %742 = vmatprep.subr.bf16.mxu0 0
    %743 = vmatpush1.bf16.xpose.msra.mxu0 0
    %744 = vmatprep.subr.bf16.mxu0 0
    %745 = vmatpush1.bf16.xpose.msra.mxu0 0
    %746 = vmatprep.subr.bf16.mxu0 0
    %747 = vmatpush1.bf16.xpose.msra.mxu0 0
    %748 = vmatprep.subr.bf16.mxu0 0
    %749 = vmatpush1.bf16.xpose.msra.mxu0 0
    %750 = vmatprep.subr.bf16.mxu0 0
    %751 = vmatpush1.bf16.xpose.msra.mxu0 0
    %752 = vmatprep.subr.bf16.mxu0 0
    %753 = vmatpush1.bf16.xpose.msra.mxu0 0
    %754 = vmatprep.subr.bf16.mxu0 0
    %755 = vmatpush1.bf16.xpose.msra.mxu0 0
    %756 = vmatprep.subr.bf16.mxu0 0
    %757 = vmatpush1.bf16.xpose.msra.mxu0 0
    %758 = vmatprep.subr.bf16.mxu0 0
    %759 = vmatpush1.bf16.xpose.msra.mxu0 0
    %760 = vmatprep.subr.bf16.mxu0 0
    %761 = vmatpush1.bf16.xpose.msra.mxu0 0
    %762 = vmatprep.subr.bf16.mxu0 0
    %763 = vmatpush1.bf16.xpose.msra.mxu0 0
    %764 = vmatprep.subr.bf16.mxu0 0
    %765 = vmatpush1.bf16.xpose.msra.mxu0 0
    %766 = vmatprep.mubr.bf16.mxu0 0
    %767 = vmatmul.mubr.bf16.gmra.mrb[0].mxu0 %v729
    %v768 = vpop.f32.mrb[0].mxu0
    %v769 = vadd.f32 0.0, %v768
    %v770 = vpop.f32.mrb[0].mxu0
    %v771 = vpop.f32.mrb[0].mxu0
    %v772 = vpop.f32.mrb[0].mxu0
    %773 = vdwg.mxu0
    %774 = vrot.lane.b32.xlu0 %v266, 112
    %v775 = vpop.permute.xlu0 %774
    %776 = vrot.lane.b32.xlu0 %v268, 112
    %v777 = vpop.permute.xlu0 %776
    %v779 = vsel %vm271, %v775, 0
    %v782 = vsel %vm271, %v777, 0
    %784 = vmatprep.subr.bf16.mxu0 0
    %785 = vmatpush1.bf16.xpose.msra.mxu0 %v782
    %786 = vmatprep.subr.bf16.mxu0 0
    %787 = vmatpush1.bf16.xpose.msra.mxu0 0
    %788 = vmatprep.subr.bf16.mxu0 0
    %789 = vmatpush1.bf16.xpose.msra.mxu0 0
    %790 = vmatprep.subr.bf16.mxu0 0
    %791 = vmatpush1.bf16.xpose.msra.mxu0 0
    %792 = vmatprep.subr.bf16.mxu0 0
    %793 = vmatpush1.bf16.xpose.msra.mxu0 0
    %794 = vmatprep.subr.bf16.mxu0 0
    %795 = vmatpush1.bf16.xpose.msra.mxu0 0
    %796 = vmatprep.subr.bf16.mxu0 0
    %797 = vmatpush1.bf16.xpose.msra.mxu0 0
    %798 = vmatprep.subr.bf16.mxu0 0
    %799 = vmatpush1.bf16.xpose.msra.mxu0 0
    %800 = vmatprep.subr.bf16.mxu0 0
    %801 = vmatpush1.bf16.xpose.msra.mxu0 0
    %802 = vmatprep.subr.bf16.mxu0 0
    %803 = vmatpush1.bf16.xpose.msra.mxu0 0
    %804 = vmatprep.subr.bf16.mxu0 0
    %805 = vmatpush1.bf16.xpose.msra.mxu0 0
    %806 = vmatprep.subr.bf16.mxu0 0
    %807 = vmatpush1.bf16.xpose.msra.mxu0 0
    %808 = vmatprep.subr.bf16.mxu0 0
    %809 = vmatpush1.bf16.xpose.msra.mxu0 0
    %810 = vmatprep.subr.bf16.mxu0 0
    %811 = vmatpush1.bf16.xpose.msra.mxu0 0
    %812 = vmatprep.subr.bf16.mxu0 0
    %813 = vmatpush1.bf16.xpose.msra.mxu0 0
    %814 = vmatprep.subr.bf16.mxu0 0
    %815 = vmatpush1.bf16.xpose.msra.mxu0 0
    %816 = vmatprep.mubr.bf16.mxu0 0
    %817 = vmatmul.mubr.bf16.gmra.mrb[0].mxu0 %v779
    %v818 = vpop.f32.mrb[0].mxu0
    %v819 = vadd.f32 0.0, %v818
    %v820 = vpop.f32.mrb[0].mxu0
    %v821 = vpop.f32.mrb[0].mxu0
    %v822 = vpop.f32.mrb[0].mxu0
    %823 = vdwg.mxu0
    %v824 = vsel %vm271, %v769, -inf
    %825 = vmax.xlane.f32.xlu0 %v824
    %v826 = vpop.xlane.xlu0 %825
    %v827 = vsel %vm271, %v819, -inf
    %828 = vmax.xlane.f32.xlu0 %v827
    %v829 = vpop.xlane.xlu0 %828
    %v830 = vsub.f32 %v769, %v826
    %v831 = vsub.f32 %v819, %v829
    %v832 = vmul.f32 %v830, 1.442695
    %v833 = vpow.pop %v832
    %v834 = vmul.f32 %v831, 1.442695
    %v835 = vpow.pop %v834
    %v836 = vsel %vm271, %v833, 0.0
    %837 = vadd.xlane.f32.xlu0 %v836
    %v838 = vpop.xlane.xlu0 %837
    %v839 = vsel %vm271, %v835, 0.0
    %840 = vadd.xlane.f32.xlu0 %v839
    %v841 = vpop.xlane.xlu0 %840
    %v842 = vrcp.pop %v838
    %v843 = vrcp.pop %v841
    %v844 = vmul.f32 %v833, %v842
    %v845 = vmul.f32 %v835, %v843
    %v846 = vadd.f32 %v611, %v844
    %v847 = vadd.f32 %v612, %v845
    %v848 = vpack.c.bf16 %v844, %v844
    %v849 = vpack.c.bf16 %v845, %v845
    %850 = vrot.lane.b32.xlu0 %v269, 112
    %v851 = vpop.permute.xlu0 %850
    %v853 = vsel %vm271, %v848, 0
    %v856 = vsel %vm393, %v851, 0
    %858 = vmatprep.subr.bf16.mxu0 0
    %859 = vmatpush1.bf16.msra.mxu0 %v856
    %860 = vmatprep.subr.bf16.mxu0 0
    %861 = vmatpush1.bf16.msra.mxu0 0
    %862 = vmatprep.subr.bf16.mxu0 0
    %863 = vmatpush1.bf16.msra.mxu0 0
    %864 = vmatprep.subr.bf16.mxu0 0
    %865 = vmatpush1.bf16.msra.mxu0 0
    %866 = vmatprep.subr.bf16.mxu0 0
    %867 = vmatpush1.bf16.msra.mxu0 0
    %868 = vmatprep.subr.bf16.mxu0 0
    %869 = vmatpush1.bf16.msra.mxu0 0
    %870 = vmatprep.subr.bf16.mxu0 0
    %871 = vmatpush1.bf16.msra.mxu0 0
    %872 = vmatprep.subr.bf16.mxu0 0
    %873 = vmatpush1.bf16.msra.mxu0 0
    %874 = vmatprep.subr.bf16.mxu0 0
    %875 = vmatpush1.bf16.msra.mxu0 0
    %876 = vmatprep.subr.bf16.mxu0 0
    %877 = vmatpush1.bf16.msra.mxu0 0
    %878 = vmatprep.subr.bf16.mxu0 0
    %879 = vmatpush1.bf16.msra.mxu0 0
    %880 = vmatprep.subr.bf16.mxu0 0
    %881 = vmatpush1.bf16.msra.mxu0 0
    %882 = vmatprep.subr.bf16.mxu0 0
    %883 = vmatpush1.bf16.msra.mxu0 0
    %884 = vmatprep.subr.bf16.mxu0 0
    %885 = vmatpush1.bf16.msra.mxu0 0
    %886 = vmatprep.subr.bf16.mxu0 0
    %887 = vmatpush1.bf16.msra.mxu0 0
    %888 = vmatprep.subr.bf16.mxu0 0
    %889 = vmatpush1.bf16.msra.mxu0 0
    %890 = vmatprep.mubr.bf16.mxu0 0
    %891 = vmatmul.mubr.bf16.gmra.mrb[0].mxu0 %v853
    %v892 = vpop.f32.mrb[0].mxu0
    %v893 = vadd.f32 0.0, %v892
    %v894 = vpop.f32.mrb[0].mxu0
    %v895 = vpop.f32.mrb[0].mxu0
    %v896 = vpop.f32.mrb[0].mxu0
    %897 = vdwg.mxu0
    %898 = vrot.lane.b32.xlu0 %v270, 112
    %v899 = vpop.permute.xlu0 %898
    %v901 = vsel %vm271, %v849, 0
    %v904 = vsel %vm393, %v899, 0
    %906 = vmatprep.subr.bf16.mxu0 0
    %907 = vmatpush1.bf16.msra.mxu0 %v904
    %908 = vmatprep.subr.bf16.mxu0 0
    %909 = vmatpush1.bf16.msra.mxu0 0
    %910 = vmatprep.subr.bf16.mxu0 0
    %911 = vmatpush1.bf16.msra.mxu0 0
    %912 = vmatprep.subr.bf16.mxu0 0
    %913 = vmatpush1.bf16.msra.mxu0 0
    %914 = vmatprep.subr.bf16.mxu0 0
    %915 = vmatpush1.bf16.msra.mxu0 0
    %916 = vmatprep.subr.bf16.mxu0 0
    %917 = vmatpush1.bf16.msra.mxu0 0
    %918 = vmatprep.subr.bf16.mxu0 0
    %919 = vmatpush1.bf16.msra.mxu0 0
    %920 = vmatprep.subr.bf16.mxu0 0
    %921 = vmatpush1.bf16.msra.mxu0 0
    %922 = vmatprep.subr.bf16.mxu0 0
    %923 = vmatpush1.bf16.msra.mxu0 0
    %924 = vmatprep.subr.bf16.mxu0 0
    %925 = vmatpush1.bf16.msra.mxu0 0
    %926 = vmatprep.subr.bf16.mxu0 0
    %927 = vmatpush1.bf16.msra.mxu0 0
    %928 = vmatprep.subr.bf16.mxu0 0
    %929 = vmatpush1.bf16.msra.mxu0 0
    %930 = vmatprep.subr.bf16.mxu0 0
    %931 = vmatpush1.bf16.msra.mxu0 0
    %932 = vmatprep.subr.bf16.mxu0 0
    %933 = vmatpush1.bf16.msra.mxu0 0
    %934 = vmatprep.subr.bf16.mxu0 0
    %935 = vmatpush1.bf16.msra.mxu0 0
    %936 = vmatprep.subr.bf16.mxu0 0
    %937 = vmatpush1.bf16.msra.mxu0 0
    %938 = vmatprep.mubr.bf16.mxu0 0
    %939 = vmatmul.mubr.bf16.gmra.mrb[0].mxu0 %v901
    %v940 = vpop.f32.mrb[0].mxu0
    %v941 = vadd.f32 0.0, %v940
    %v942 = vpop.f32.mrb[0].mxu0
    %v943 = vpop.f32.mrb[0].mxu0
    %v944 = vpop.f32.mrb[0].mxu0
    %945 = vdwg.mxu0
    %948 = vrot.lane.b32.xlu0 %v893, 16
    %v949 = vpop.permute.xlu0 %948
    %950 = vrot.lane.b32.xlu0 %v941, 16
    %v951 = vpop.permute.xlu0 %950
    %vm954 = vcmask 195712
    %955 = vst.msk [vmem:[#allocation2] sm:$0xff] %vm954, %v949
    %956 = vst.msk [vmem:[#allocation2 + $0x8] sm:$0xff] %vm954, %v951
    %957 = vrot.lane.b32.xlu0 %v265, 104
    %v958 = vpop.permute.xlu0 %957
    %959 = vrot.lane.b32.xlu0 %v267, 104
    %v960 = vpop.permute.xlu0 %959
    %v962 = vsel %vm271, %v958, 0
    %v965 = vsel %vm271, %v960, 0
    %967 = vmatprep.subr.bf16.mxu0 0
    %968 = vmatpush1.bf16.xpose.msra.mxu0 %v965
    %969 = vmatprep.subr.bf16.mxu0 0
    %970 = vmatpush1.bf16.xpose.msra.mxu0 0
    %971 = vmatprep.subr.bf16.mxu0 0
    %972 = vmatpush1.bf16.xpose.msra.mxu0 0
    %973 = vmatprep.subr.bf16.mxu0 0
    %974 = vmatpush1.bf16.xpose.msra.mxu0 0
    %975 = vmatprep.subr.bf16.mxu0 0
    %976 = vmatpush1.bf16.xpose.msra.mxu0 0
    %977 = vmatprep.subr.bf16.mxu0 0
    %978 = vmatpush1.bf16.xpose.msra.mxu0 0
    %979 = vmatprep.subr.bf16.mxu0 0
    %980 = vmatpush1.bf16.xpose.msra.mxu0 0
    %981 = vmatprep.subr.bf16.mxu0 0
    %982 = vmatpush1.bf16.xpose.msra.mxu0 0
    %983 = vmatprep.subr.bf16.mxu0 0
    %984 = vmatpush1.bf16.xpose.msra.mxu0 0
    %985 = vmatprep.subr.bf16.mxu0 0
    %986 = vmatpush1.bf16.xpose.msra.mxu0 0
    %987 = vmatprep.subr.bf16.mxu0 0
    %988 = vmatpush1.bf16.xpose.msra.mxu0 0
    %989 = vmatprep.subr.bf16.mxu0 0
    %990 = vmatpush1.bf16.xpose.msra.mxu0 0
    %991 = vmatprep.subr.bf16.mxu0 0
    %992 = vmatpush1.bf16.xpose.msra.mxu0 0
    %993 = vmatprep.subr.bf16.mxu0 0
    %994 = vmatpush1.bf16.xpose.msra.mxu0 0
    %995 = vmatprep.subr.bf16.mxu0 0
    %996 = vmatpush1.bf16.xpose.msra.mxu0 0
    %997 = vmatprep.subr.bf16.mxu0 0
    %998 = vmatpush1.bf16.xpose.msra.mxu0 0
    %999 = vmatprep.mubr.bf16.mxu0 0
    %1000 = vmatmul.mubr.bf16.gmra.mrb[0].mxu0 %v962
    %v1001 = vpop.f32.mrb[0].mxu0
    %v1002 = vadd.f32 0.0, %v1001
    %v1003 = vpop.f32.mrb[0].mxu0
    %v1004 = vpop.f32.mrb[0].mxu0
    %v1005 = vpop.f32.mrb[0].mxu0
    %1006 = vdwg.mxu0
    %1007 = vrot.lane.b32.xlu0 %v266, 104
    %v1008 = vpop.permute.xlu0 %1007
    %1009 = vrot.lane.b32.xlu0 %v268, 104
    %v1010 = vpop.permute.xlu0 %1009
    %v1012 = vsel %vm271, %v1008, 0
    %v1015 = vsel %vm271, %v1010, 0
    %1017 = vmatprep.subr.bf16.mxu0 0
    %1018 = vmatpush1.bf16.xpose.msra.mxu0 %v1015
    %1019 = vmatprep.subr.bf16.mxu0 0
    %1020 = vmatpush1.bf16.xpose.msra.mxu0 0
    %1021 = vmatprep.subr.bf16.mxu0 0
    %1022 = vmatpush1.bf16.xpose.msra.mxu0 0
    %1023 = vmatprep.subr.bf16.mxu0 0
    %1024 = vmatpush1.bf16.xpose.msra.mxu0 0
    %1025 = vmatprep.subr.bf16.mxu0 0
    %1026 = vmatpush1.bf16.xpose.msra.mxu0 0
    %1027 = vmatprep.subr.bf16.mxu0 0
    %1028 = vmatpush1.bf16.xpose.msra.mxu0 0
    %1029 = vmatprep.subr.bf16.mxu0 0
    %1030 = vmatpush1.bf16.xpose.msra.mxu0 0
    %1031 = vmatprep.subr.bf16.mxu0 0
    %1032 = vmatpush1.bf16.xpose.msra.mxu0 0
    %1033 = vmatprep.subr.bf16.mxu0 0
    %1034 = vmatpush1.bf16.xpose.msra.mxu0 0
    %1035 = vmatprep.subr.bf16.mxu0 0
    %1036 = vmatpush1.bf16.xpose.msra.mxu0 0
    %1037 = vmatprep.subr.bf16.mxu0 0
    %1038 = vmatpush1.bf16.xpose.msra.mxu0 0
    %1039 = vmatprep.subr.bf16.mxu0 0
    %1040 = vmatpush1.bf16.xpose.msra.mxu0 0
    %1041 = vmatprep.subr.bf16.mxu0 0
    %1042 = vmatpush1.bf16.xpose.msra.mxu0 0
    %1043 = vmatprep.subr.bf16.mxu0 0
    %1044 = vmatpush1.bf16.xpose.msra.mxu0 0
    %1045 = vmatprep.subr.bf16.mxu0 0
    %1046 = vmatpush1.bf16.xpose.msra.mxu0 0
    %1047 = vmatprep.subr.bf16.mxu0 0
    %1048 = vmatpush1.bf16.xpose.msra.mxu0 0
    %1049 = vmatprep.mubr.bf16.mxu0 0
    %1050 = vmatmul.mubr.bf16.gmra.mrb[0].mxu0 %v1012
    %v1051 = vpop.f32.mrb[0].mxu0
    %v1052 = vadd.f32 0.0, %v1051
    %v1053 = vpop.f32.mrb[0].mxu0
    %v1054 = vpop.f32.mrb[0].mxu0
    %v1055 = vpop.f32.mrb[0].mxu0
    %1056 = vdwg.mxu0
    %v1057 = vsel %vm271, %v1002, -inf
    %1058 = vmax.xlane.f32.xlu0 %v1057
    %v1059 = vpop.xlane.xlu0 %1058
    %v1060 = vsel %vm271, %v1052, -inf
    %1061 = vmax.xlane.f32.xlu0 %v1060
    %v1062 = vpop.xlane.xlu0 %1061
    %v1063 = vsub.f32 %v1002, %v1059
    %v1064 = vsub.f32 %v1052, %v1062
    %v1065 = vmul.f32 %v1063, 1.442695
    %v1066 = vpow.pop %v1065
    %v1067 = vmul.f32 %v1064, 1.442695
    %v1068 = vpow.pop %v1067
    %v1069 = vsel %vm271, %v1066, 0.0
    %1070 = vadd.xlane.f32.xlu0 %v1069
    %v1071 = vpop.xlane.xlu0 %1070
    %v1072 = vsel %vm271, %v1068, 0.0
    %1073 = vadd.xlane.f32.xlu0 %v1072
    %v1074 = vpop.xlane.xlu0 %1073
    %v1075 = vrcp.pop %v1071
    %v1076 = vrcp.pop %v1074
    %v1077 = vmul.f32 %v1066, %v1075
    %v1078 = vmul.f32 %v1068, %v1076
    %v1079 = vadd.f32 %v846, %v1077
    %v1080 = vadd.f32 %v847, %v1078
    %v1081 = vpack.c.bf16 %v1077, %v1077
    %v1082 = vpack.c.bf16 %v1078, %v1078
    %1083 = vrot.lane.b32.xlu0 %v269, 104
    %v1084 = vpop.permute.xlu0 %1083
    %v1086 = vsel %vm271, %v1081, 0
    %v1089 = vsel %vm393, %v1084, 0
    %1091 = vmatprep.subr.bf16.mxu0 0
    %1092 = vmatpush1.bf16.msra.mxu0 %v1089
    %1093 = vmatprep.subr.bf16.mxu0 0
    %1094 = vmatpush1.bf16.msra.mxu0 0
    %1095 = vmatprep.subr.bf16.mxu0 0
    %1096 = vmatpush1.bf16.msra.mxu0 0
    %1097 = vmatprep.subr.bf16.mxu0 0
    %1098 = vmatpush1.bf16.msra.mxu0 0
    %1099 = vmatprep.subr.bf16.mxu0 0
    %1100 = vmatpush1.bf16.msra.mxu0 0
    %1101 = vmatprep.subr.bf16.mxu0 0
    %1102 = vmatpush1.bf16.msra.mxu0 0
    %1103 = vmatprep.subr.bf16.mxu0 0
    %1104 = vmatpush1.bf16.msra.mxu0 0
    %1105 = vmatprep.subr.bf16.mxu0 0
    %1106 = vmatpush1.bf16.msra.mxu0 0
    %1107 = vmatprep.subr.bf16.mxu0 0
    %1108 = vmatpush1.bf16.msra.mxu0 0
    %1109 = vmatprep.subr.bf16.mxu0 0
    %1110 = vmatpush1.bf16.msra.mxu0 0
    %1111 = vmatprep.subr.bf16.mxu0 0
    %1112 = vmatpush1.bf16.msra.mxu0 0
    %1113 = vmatprep.subr.bf16.mxu0 0
    %1114 = vmatpush1.bf16.msra.mxu0 0
    %1115 = vmatprep.subr.bf16.mxu0 0
    %1116 = vmatpush1.bf16.msra.mxu0 0
    %1117 = vmatprep.subr.bf16.mxu0 0
    %1118 = vmatpush1.bf16.msra.mxu0 0
    %1119 = vmatprep.subr.bf16.mxu0 0
    %1120 = vmatpush1.bf16.msra.mxu0 0
    %1121 = vmatprep.subr.bf16.mxu0 0
    %1122 = vmatpush1.bf16.msra.mxu0 0
    %1123 = vmatprep.mubr.bf16.mxu0 0
    %1124 = vmatmul.mubr.bf16.gmra.mrb[0].mxu0 %v1086
    %v1125 = vpop.f32.mrb[0].mxu0
    %v1126 = vadd.f32 0.0, %v1125
    %v1127 = vpop.f32.mrb[0].mxu0
    %v1128 = vpop.f32.mrb[0].mxu0
    %v1129 = vpop.f32.mrb[0].mxu0
    %1130 = vdwg.mxu0
    %1131 = vrot.lane.b32.xlu0 %v270, 104
    %v1132 = vpop.permute.xlu0 %1131
    %v1134 = vsel %vm271, %v1082, 0
    %v1137 = vsel %vm393, %v1132, 0
    %1139 = vmatprep.subr.bf16.mxu0 0
    %1140 = vmatpush1.bf16.msra.mxu0 %v1137
    %1141 = vmatprep.subr.bf16.mxu0 0
    %1142 = vmatpush1.bf16.msra.mxu0 0
    %1143 = vmatprep.subr.bf16.mxu0 0
    %1144 = vmatpush1.bf16.msra.mxu0 0
    %1145 = vmatprep.subr.bf16.mxu0 0
    %1146 = vmatpush1.bf16.msra.mxu0 0
    %1147 = vmatprep.subr.bf16.mxu0 0
    %1148 = vmatpush1.bf16.msra.mxu0 0
    %1149 = vmatprep.subr.bf16.mxu0 0
    %1150 = vmatpush1.bf16.msra.mxu0 0
    %1151 = vmatprep.subr.bf16.mxu0 0
    %1152 = vmatpush1.bf16.msra.mxu0 0
    %1153 = vmatprep.subr.bf16.mxu0 0
    %1154 = vmatpush1.bf16.msra.mxu0 0
    %1155 = vmatprep.subr.bf16.mxu0 0
    %1156 = vmatpush1.bf16.msra.mxu0 0
    %1157 = vmatprep.subr.bf16.mxu0 0
    %1158 = vmatpush1.bf16.msra.mxu0 0
    %1159 = vmatprep.subr.bf16.mxu0 0
    %1160 = vmatpush1.bf16.msra.mxu0 0
    %1161 = vmatprep.subr.bf16.mxu0 0
    %1162 = vmatpush1.bf16.msra.mxu0 0
    %1163 = vmatprep.subr.bf16.mxu0 0
    %1164 = vmatpush1.bf16.msra.mxu0 0
    %1165 = vmatprep.subr.bf16.mxu0 0
    %1166 = vmatpush1.bf16.msra.mxu0 0
    %1167 = vmatprep.subr.bf16.mxu0 0
    %1168 = vmatpush1.bf16.msra.mxu0 0
    %1169 = vmatprep.subr.bf16.mxu0 0
    %1170 = vmatpush1.bf16.msra.mxu0 0
    %1171 = vmatprep.mubr.bf16.mxu0 0
    %1172 = vmatmul.mubr.bf16.gmra.mrb[0].mxu0 %v1134
    %v1173 = vpop.f32.mrb[0].mxu0
    %v1174 = vadd.f32 0.0, %v1173
    %v1175 = vpop.f32.mrb[0].mxu0
    %v1176 = vpop.f32.mrb[0].mxu0
    %v1177 = vpop.f32.mrb[0].mxu0
    %1178 = vdwg.mxu0
    %1181 = vrot.lane.b32.xlu0 %v1126, 24
    %v1182 = vpop.permute.xlu0 %1181
    %1183 = vrot.lane.b32.xlu0 %v1174, 24
    %v1184 = vpop.permute.xlu0 %1183
    %vm1187 = vcmask 261312
    %1188 = vst.msk [vmem:[#allocation2] sm:$0xff] %vm1187, %v1182
    %1189 = vst.msk [vmem:[#allocation2 + $0x8] sm:$0xff] %vm1187, %v1184
    %v1190 = vld [vmem:[#allocation2] sm:$0xff]
    %v1191 = vld [vmem:[#allocation2 + $0x8] sm:$0xff]
    %v1192 = vpack.c.bf16 %v1191, %v1190
    %v1193 = vld [vmem:[%s9] sm:$0xf]
    %v1194 = vld [vmem:[%s9 + $0x4] sm:$0xf]
    %v1195 = vld [vmem:[%s9 + $0x8] sm:$0xf]
    %v1196 = vld [vmem:[%s9 + $0xc] sm:$0xf]
    %v1197 = vld [vmem:[%s10] sm:$0x1]
    %v1199 = vlaneseq
    %v1200 = vshrl.u32 %v1199, 7
    %v1201 = vsub.s32 0, %v1200
    %v1202 = vrot.slane %v1197, %v1201
    %v1208 = vunpack.c.l.b16 %v1193
    %v1209 = vunpack.c.l.b16 %v1194
    %v1210 = vunpack.c.l.b16 %v1195
    %v1211 = vunpack.c.l.b16 %v1196
    %v1212 = vpack.c.b16 %v1209, %v1208
    %v1213 = vpack.c.b16 %v1211, %v1210
    %v1217 = vsel %vm76, %v1192, 0
    %1219 = vmatprep.subr.bf16.mxu0 0
    %1220 = vmatpush1.bf16.msra.mxu0 %v1212
    %1221 = vmatprep.subr.bf16.mxu0 0
    %1222 = vmatpush1.bf16.msra.mxu0 %v1213
    %1223 = vmatprep.subr.bf16.mxu0 0
    %1224 = vmatpush1.bf16.msra.mxu0 0
    %1225 = vmatprep.subr.bf16.mxu0 0
    %1226 = vmatpush1.bf16.msra.mxu0 0
    %1227 = vmatprep.subr.bf16.mxu0 0
    %1228 = vmatpush1.bf16.msra.mxu0 0
    %1229 = vmatprep.subr.bf16.mxu0 0
    %1230 = vmatpush1.bf16.msra.mxu0 0
    %1231 = vmatprep.subr.bf16.mxu0 0
    %1232 = vmatpush1.bf16.msra.mxu0 0
    %1233 = vmatprep.subr.bf16.mxu0 0
    %1234 = vmatpush1.bf16.msra.mxu0 0
    %1235 = vmatprep.subr.bf16.mxu0 0
    %1236 = vmatpush1.bf16.msra.mxu0 0
    %1237 = vmatprep.subr.bf16.mxu0 0
    %1238 = vmatpush1.bf16.msra.mxu0 0
    %1239 = vmatprep.subr.bf16.mxu0 0
    %1240 = vmatpush1.bf16.msra.mxu0 0
    %1241 = vmatprep.subr.bf16.mxu0 0
    %1242 = vmatpush1.bf16.msra.mxu0 0
    %1243 = vmatprep.subr.bf16.mxu0 0
    %1244 = vmatpush1.bf16.msra.mxu0 0
    %1245 = vmatprep.subr.bf16.mxu0 0
    %1246 = vmatpush1.bf16.msra.mxu0 0
    %1247 = vmatprep.subr.bf16.mxu0 0
    %1248 = vmatpush1.bf16.msra.mxu0 0
    %1249 = vmatprep.subr.bf16.mxu0 0
    %1250 = vmatpush1.bf16.msra.mxu0 0
    %1251 = vmatprep.mubr.bf16.mxu0 0
    %1252 = vmatmul.mubr.bf16.gmra.mrb[0].mxu0 %v1217
    %v1253 = vpop.f32.mrb[0].mxu0
    %v1254 = vadd.f32 %v1202, %v1253
    %v1255 = vpop.f32.mrb[0].mxu0
    %v1256 = vpop.f32.mrb[0].mxu0
    %v1257 = vadd.f32 %v1202, %v1256
    %v1258 = vpop.f32.mrb[0].mxu0
    %1259 = vdwg.mxu0
    %1260 = vst.msk [vmem:[%s11] sm:$0xff] %vm76, %v1254
    %1261 = vst.msk [vmem:[%s11 + $0x8] sm:$0xff] %vm76, %v1257
    %v1262 = vmul.f32 %v1079, 0.25
    %v1263 = vmul.f32 %v1080, 0.25
    %1264 = vst.msk [vmem:[#allocation3] sm:$0xff] %vm271, %v1262
    %1265 = vst.msk [vmem:[#allocation3 + $0x8] sm:$0xff] %vm271, %v1263
    // Predicated region
    $region46: #{cross_attention_forward.1} parent=1 // pred_check
      _
    $region47: #{cross_attention_forward.1} parent=1 // pred_check_branch
      %1267 = sbr.rel (0) target = $region49
    $region48: #{cross_attention_forward.1} parent=1 // pred_region
      _
    $region49: #{cross_attention_forward.1} parent=1 // pred_fallthru
      _
    // Predicated region
    $region50: #{cross_attention_forward.1} parent=1 // pred_check
      _
    $region51: #{cross_attention_forward.1} parent=1 // pred_check_branch
      %1269 = sbr.rel (0) target = $region53
    $region52: #{cross_attention_forward.1} parent=1 // pred_region
      %s1271 = ssub.s32 256, 256
      %1272 = vsyncadd [#allocation4], %s1271
      %s1273 = sshll.u32 [#allocation3], 4
      %s1274 = int_to_ptr.vmem [resolvable:$true] %s1273
      %1279 = dma.vmem_to_hbm [thread:$0]  %s1274, 256, %s12, [#allocation4], 128, 128, 8
    $region53: #{cross_attention_forward.1} parent=1 // pred_fallthru
      _
    // Predicated region
    $region54: #{cross_attention_forward.1} parent=1 // pred_check
      _
    $region55: #{cross_attention_forward.1} parent=1 // pred_check_branch
      %1281 = sbr.rel (0) target = $region57
    $region56: #{cross_attention_forward.1} parent=1 // pred_region
      _
    $region57: #{cross_attention_forward.1} parent=1 // pred_fallthru
      _
    // Predicated region
    $region58: #{cross_attention_forward.1} parent=1 // pred_check
      _
    $region59: #{cross_attention_forward.1} parent=1 // pred_check_branch
      %1283 = sbr.rel (0) target = $region61
    $region60: #{cross_attention_forward.1} parent=1 // pred_region
      %1284 = dma.done [#allocation4], 256
    $region61: #{cross_attention_forward.1} parent=1 // pred_fallthru
      _
    %1285 = vsyncpa [#allocation4], 1

</llo_original>
